<compile_context>
chip_gen: v7x
topology: tpu7x:2x2x1
jax: 0.10.0
libtpu: 0.0.40
codegen_flags: <defaults>
</compile_context>

<pallas_src>
import functools

import jax
import jax.numpy as jnp
from jax.experimental import pallas as pl
from jax.experimental.pallas import tpu as pltpu


# -----------------------------------------------------------------------------
# Pallas kernel: prednet MLP head over one batch tile
# -----------------------------------------------------------------------------
def prednet_kernel(x_ref, w1_ref, b1_ref, w2_ref, b2_ref, w3_ref, b3_ref,
                   out_ref, *, act_dtype):
    x = x_ref[...]                                          # (TB, 2D) bf16

    # Linear(2D -> 2D): concat already fused in the wrapper -> one K=2D matmul.
    h1 = jnp.dot(x, w1_ref[...], preferred_element_type=jnp.float32) + b1_ref[...]
    h1 = jax.nn.sigmoid(h1.astype(act_dtype))               # Sigmoid (Dropout=identity)

    # Linear(2D -> D)
    h2 = (jnp.dot(h1.astype(w2_ref.dtype), w2_ref[...],
                  preferred_element_type=jnp.float32) + b2_ref[...])
    h2 = jax.nn.sigmoid(h2.astype(act_dtype))               # Sigmoid (Dropout=identity)

    # Linear(D -> 1) as VPU multiply + lane reduction (no degenerate N=1 matmul).
    logits = (jnp.sum(h2.astype(jnp.float32) * w3_ref[...], axis=-1, keepdims=True)
              + b3_ref[0, 0])                               # (TB, 1)

    out_ref[...] = jax.nn.sigmoid(logits).astype(out_ref.dtype)


# -----------------------------------------------------------------------------
# Wrapper: batch-gridded pallas_call with VMEM-resident weights
# -----------------------------------------------------------------------------
def _sigmoid_act_dtype():
    # bf16 VPU/EUP only exists on v6e / v7x; keep f32 sigmoids on v5e and older.
    try:
        kind = jax.devices()[0].device_kind.lower()
    except Exception:
        return jnp.float32
    if ("v6" in kind) or ("v7" in kind) or ("7x" in kind):
        return jnp.bfloat16
    return jnp.float32


def prednet_pallas(exer_emb, u_pos, params, *, max_tb=1024):
    B, D = exer_emb.shape
    w1, b1, w2, b2, w3row, b3 = params

    # Batch tile: multiple of 128, at most ceil(B/2) rounded to 128 so the grid
    # has >=2 steps when the batch allows it (v7x megacore), capped at max_tb.
    half = pl.cdiv(pl.cdiv(B, 2), 128) * 128
    TB = max(128, min(max_tb, half))
    G = pl.cdiv(B, TB)
    B_pad = G * TB

    # Fused concat [exer_emb | u_pos] -> single (B_pad, 2D) bf16 activation.
    x = jnp.concatenate([exer_emb, u_pos], axis=1)
    x = jnp.pad(x, ((0, B_pad - B), (0, 0))).astype(jnp.bfloat16)

    act_dtype = _sigmoid_act_dtype()
    kernel = functools.partial(prednet_kernel, act_dtype=act_dtype)

    # ---- VMEM budget: weights (single-buffered) + 2x activation/output tiles
    #      + f32 temps (h1, h2) with headroom; clamp to <=48 MiB (v7x-safe). ----
    weights_bytes = (2 * D * 2 * D + 2 * D * D) * 2 + (2 * D + D + D + 1) * 4
    act_tile_bytes = TB * 2 * D * 2            # bf16 input tile
    out_tile_bytes = TB * 4                    # f32 output tile
    temp_bytes = TB * 2 * D * 4 + TB * D * 4   # f32 h1 + h2 upper bound
    vmem_limit = int(weights_bytes + 2 * (act_tile_bytes + out_tile_bytes)
                     + 3 * temp_bytes + (8 << 20))
    vmem_limit = max(16 << 20, min(vmem_limit, 48 << 20))

    cost = pl.CostEstimate(
        flops=int(2 * B_pad * (2 * D * 2 * D + 2 * D * D) + 2 * B_pad * D),
        transcendentals=int(B_pad * (3 * D + 1)),
        bytes_accessed=int(B_pad * 2 * D * 2 + weights_bytes + B_pad * 4),
    )

    def build_and_call(single_buffer_weights):
        if single_buffer_weights:
            # Weights never change across the grid -> single buffer, halves
            # their VMEM footprint vs. default double-buffering.
            const2d = lambda shape: pl.BlockSpec(shape, lambda i: (0, 0),
                                                 pipeline_mode=pl.Buffered(1))
        else:
            const2d = lambda shape: pl.BlockSpec(shape, lambda i: (0, 0))
        return pl.pallas_call(
            kernel,
            out_shape=jax.ShapeDtypeStruct((B_pad, 1), jnp.float32),
            grid=(G,),
            in_specs=[
                pl.BlockSpec((TB, 2 * D), lambda i: (i, 0)),        # fused activation
                const2d((2 * D, 2 * D)),                            # W1 (bf16)
                const2d((1, 2 * D)),                                # b1 (f32)
                const2d((2 * D, D)),                                # W2 (bf16)
                const2d((1, D)),                                    # b2 (f32)
                const2d((1, D)),                                    # w3 row (f32, VPU)
                pl.BlockSpec(memory_space=pltpu.MemorySpace.SMEM),  # b3 scalar
            ],
            out_specs=pl.BlockSpec((TB, 1), lambda i: (i, 0)),
            compiler_params=pltpu.CompilerParams(
                dimension_semantics=("parallel",),
                vmem_limit_bytes=vmem_limit,
            ),
            cost_estimate=cost,
        )(x, w1, b1, w2, b2, w3row, b3)

    try:
        out = build_and_call(True)        # single-buffered resident weights
    except Exception:
        out = build_and_call(False)       # safe fallback: default buffering
    # Drop padded rows; squeeze the feature axis.
    return out[:B, 0]


# -----------------------------------------------------------------------------
# Parameter construction (matches the PyTorch init scheme)
# -----------------------------------------------------------------------------
def xavier_uniform(key, fan_in, fan_out):
    bound = (6.0 / (fan_in + fan_out)) ** 0.5
    return jax.random.uniform(key, (fan_in, fan_out), jnp.float32, -bound, bound)


def make_params(key, num_students, d_model, vocab_size):
    keys = jax.random.split(key, 5)
    # stu_pos embedding: normal(0, 0.1)
    stu_pos = 0.1 * jax.random.normal(keys[0], (num_students, d_model), jnp.float32)

    # prednet: Linear(2D->2D), Linear(2D->D), Linear(D->1); xavier_uniform W, zero b.
    w1 = xavier_uniform(keys[1], 2 * d_model, 2 * d_model).astype(jnp.bfloat16)  # (2D, 2D) [in,out]
    b1 = jnp.zeros((1, 2 * d_model), jnp.float32)
    w2 = xavier_uniform(keys[2], 2 * d_model, d_model).astype(jnp.bfloat16)      # (2D, D)
    b2 = jnp.zeros((1, d_model), jnp.float32)
    w3 = xavier_uniform(keys[3], d_model, 1)                                     # (D, 1)
    w3row = w3.reshape(1, d_model)                                               # (1, D) for VPU reduce
    b3 = jnp.zeros((1, 1), jnp.float32)                                          # scalar, SMEM

    # stand-in "BERT" token embedding table (deterministic synthetic encoder)
    tok_emb = 0.02 * jax.random.normal(keys[4], (vocab_size, d_model), jnp.float32)

    prednet = (w1, b1, w2, b2, w3row, b3)
    return stu_pos, prednet, tok_emb


# -----------------------------------------------------------------------------
# Forward: mirrors Baseline_FFT.forward
# -----------------------------------------------------------------------------
def baseline_fft_forward(stu_ids, input_ids, attention_mask,
                         stu_pos_table, prednet_params, tok_emb):
    # student embedding lookup (glue)
    u_pos = jnp.take(stu_pos_table, stu_ids, axis=0)                 # (B, D)

    # TODO(synk): stand-in for BertModel(...).last_hidden_state[:, 0, :]
    tok = jnp.take(tok_emb, input_ids, axis=0)                       # (B, S, D)
    mask = attention_mask.astype(jnp.float32)[..., None]             # (B, S, 1)
    exer_emb = (tok * mask).sum(axis=1) / jnp.maximum(mask.sum(axis=1), 1.0)  # (B, D)

    # hot path in Pallas: prednet(cat[exer_emb, u_pos]) -> sigmoid -> squeeze
    output = prednet_pallas(exer_emb, u_pos, prednet_params)         # (B,)
    return output, exer_emb, u_pos, u_pos


if __name__ == "__main__":
    key = jax.random.PRNGKey(0)
    k_param, k_stu, k_ids = jax.random.split(key, 3)

    B = 2            # batch
    D = 32           # d_model (small synthetic stand-in for BERT hidden size)
    S = 8            # sequence length
    NUM_STUDENTS = 10
    VOCAB = 64

    stu_pos_table, prednet_params, tok_emb = make_params(k_param, NUM_STUDENTS, D, VOCAB)

    stu_ids = jax.random.randint(k_stu, (B,), 0, NUM_STUDENTS)
    input_ids = jax.random.randint(k_ids, (B, S), 0, VOCAB)
    attention_mask = jnp.ones((B, S), jnp.int32).at[:, S - 2:].set(0)

    output, exer_emb, u_pos, u_pos2 = baseline_fft_forward(
        stu_ids, input_ids, attention_mask,
        stu_pos_table, prednet_params, tok_emb)

    jax.block_until_ready((output, exer_emb, u_pos, u_pos2))
    assert output.shape == (B,)
    assert exer_emb.shape == (B, D)
    assert u_pos.shape == (B, D)
    assert bool(jnp.all((output > 0.0) & (output < 1.0)))
    print("KERNEL_OK")
</pallas_src>

<mosaic_0001>
module attributes {stable_mosaic.version = 11 : i64} {
  func.func @prednet_kernel(%arg0: i32, %arg1: memref<128x64xbf16, #tpu.memory_space<vmem>>, %arg2: memref<64x64xbf16, #tpu.memory_space<vmem>>, %arg3: memref<1x64xf32, #tpu.memory_space<vmem>>, %arg4: memref<64x32xbf16, #tpu.memory_space<vmem>>, %arg5: memref<1x32xf32, #tpu.memory_space<vmem>>, %arg6: memref<1x32xf32, #tpu.memory_space<vmem>>, %arg7: memref<1x1xf32, #tpu.memory_space<smem>>, %arg8: memref<128x1xf32, #tpu.memory_space<vmem>>) attributes {dimension_semantics = [#tpu.dimension_semantics<parallel>], iteration_bounds = array<i64: 1>, scalar_prefetch = 0 : i64, scratch_operands = 0 : i64, tpu.core_type = #tpu.core_type<tc>, window_params = [{transform_indices = @transform_0, window_bounds = array<i64: 128, 64>}, {pipeline_mode = #tpu.pipeline_mode<synchronous>, transform_indices = @transform_1, window_bounds = array<i64: 64, 64>}, {pipeline_mode = #tpu.pipeline_mode<synchronous>, transform_indices = @transform_2, window_bounds = array<i64: 1, 64>}, {pipeline_mode = #tpu.pipeline_mode<synchronous>, transform_indices = @transform_3, window_bounds = array<i64: 64, 32>}, {pipeline_mode = #tpu.pipeline_mode<synchronous>, transform_indices = @transform_4, window_bounds = array<i64: 1, 32>}, {pipeline_mode = #tpu.pipeline_mode<synchronous>, transform_indices = @transform_5, window_bounds = array<i64: 1, 32>}, {transform_indices = @transform_6, window_bounds = array<i64: 1, 1>}, {transform_indices = @transform_7, window_bounds = array<i64: 128, 1>}]} {
    %c0 = arith.constant 0 : index
    %c0_0 = arith.constant 0 : index
    %0 = vector.load %arg1[%c0, %c0_0] : memref<128x64xbf16, #tpu.memory_space<vmem>>, vector<128x64xbf16>
    %c0_1 = arith.constant 0 : index
    %c0_2 = arith.constant 0 : index
    %1 = vector.load %arg2[%c0_1, %c0_2] : memref<64x64xbf16, #tpu.memory_space<vmem>>, vector<64x64xbf16>
    %cst = arith.constant dense<0.000000e+00> : vector<128x64xf32>
    %2 = tpu.matmul %0, %1, %cst {dimension_numbers = #tpu.dot_dimension_numbers<[1], [0], [0], [1], [0, 0, 1, 1], [], []>} : vector<128x64xbf16>, vector<64x64xbf16>, vector<128x64xf32> -> vector<128x64xf32>
    %c0_3 = arith.constant 0 : index
    %c0_4 = arith.constant 0 : index
    %3 = vector.load %arg3[%c0_3, %c0_4] : memref<1x64xf32, #tpu.memory_space<vmem>>, vector<1x64xf32>
    %4 = vector.broadcast %3 : vector<1x64xf32> to vector<128x64xf32>
    %5 = arith.addf %2, %4 : vector<128x64xf32>
    %6 = arith.negf %5 : vector<128x64xf32>
    %7 = math.exp %6 : vector<128x64xf32>
    %cst_5 = arith.constant 1.000000e+00 : f32
    %8 = vector.broadcast %cst_5 : f32 to vector<128x64xf32>
    %9 = arith.addf %8, %7 : vector<128x64xf32>
    %10 = arith.divf %8, %9 : vector<128x64xf32>
    %11 = arith.truncf %10 : vector<128x64xf32> to vector<128x64xbf16>
    %c0_6 = arith.constant 0 : index
    %c0_7 = arith.constant 0 : index
    %12 = vector.load %arg4[%c0_6, %c0_7] : memref<64x32xbf16, #tpu.memory_space<vmem>>, vector<64x32xbf16>
    %cst_8 = arith.constant dense<0.000000e+00> : vector<128x32xf32>
    %13 = tpu.matmul %11, %12, %cst_8 {dimension_numbers = #tpu.dot_dimension_numbers<[1], [0], [0], [1], [0, 0, 1, 1], [], []>} : vector<128x64xbf16>, vector<64x32xbf16>, vector<128x32xf32> -> vector<128x32xf32>
    %c0_9 = arith.constant 0 : index
    %c0_10 = arith.constant 0 : index
    %14 = vector.load %arg5[%c0_9, %c0_10] : memref<1x32xf32, #tpu.memory_space<vmem>>, vector<1x32xf32>
    %15 = vector.broadcast %14 : vector<1x32xf32> to vector<128x32xf32>
    %16 = arith.addf %13, %15 : vector<128x32xf32>
    %17 = arith.negf %16 : vector<128x32xf32>
    %18 = math.exp %17 : vector<128x32xf32>
    %cst_11 = arith.constant 1.000000e+00 : f32
    %19 = vector.broadcast %cst_11 : f32 to vector<128x32xf32>
    %20 = arith.addf %19, %18 : vector<128x32xf32>
    %21 = arith.divf %19, %20 : vector<128x32xf32>
    %c0_12 = arith.constant 0 : index
    %c0_13 = arith.constant 0 : index
    %22 = vector.load %arg6[%c0_12, %c0_13] : memref<1x32xf32, #tpu.memory_space<vmem>>, vector<1x32xf32>
    %23 = vector.broadcast %22 : vector<1x32xf32> to vector<128x32xf32>
    %24 = arith.mulf %21, %23 : vector<128x32xf32>
    %cst_14 = arith.constant dense<0.000000e+00> : vector<128xf32>
    %25 = vector.multi_reduction <add>, %24, %cst_14 [1] : vector<128x32xf32> to vector<128xf32>
    %26 = vector.shape_cast %25 : vector<128xf32> to vector<128x1xf32>
    %c0_15 = arith.constant 0 : index
    %c0_16 = arith.constant 0 : index
    %27 = memref.load %arg7[%c0_15, %c0_16] : memref<1x1xf32, #tpu.memory_space<smem>>
    %28 = vector.broadcast %27 : f32 to vector<128x1xf32>
    %29 = arith.addf %26, %28 : vector<128x1xf32>
    %30 = arith.negf %29 : vector<128x1xf32>
    %31 = math.exp %30 : vector<128x1xf32>
    %cst_17 = arith.constant 1.000000e+00 : f32
    %32 = vector.broadcast %cst_17 : f32 to vector<128x1xf32>
    %33 = arith.addf %32, %31 : vector<128x1xf32>
    %34 = arith.divf %32, %33 : vector<128x1xf32>
    %c0_18 = arith.constant 0 : index
    %c0_19 = arith.constant 0 : index
    %35 = vector.load %arg8[%c0_18, %c0_19] : memref<128x1xf32, #tpu.memory_space<vmem>>, vector<128x1xf32>
    tpu.vector_store %arg8[%c0_18, %c0_19], %34 {strides = array<i32>} : memref<128x1xf32, #tpu.memory_space<vmem>>, vector<128x1xf32>,
    return
  }
  func.func @transform_0(%arg0: i32) -> (i32, i32) {
    %c0_i32 = arith.constant 0 : i32
    %c0_i32_0 = arith.constant 0 : i32
    return %arg0, %c0_i32 : i32, i32
  }
  func.func @transform_1(%arg0: i32) -> (i32, i32) {
    %c0_i32 = arith.constant 0 : i32
    %c0_i32_0 = arith.constant 0 : i32
    %c0_i32_1 = arith.constant 0 : i32
    return %c0_i32, %c0_i32_0 : i32, i32
  }
  func.func @transform_2(%arg0: i32) -> (i32, i32) {
    %c0_i32 = arith.constant 0 : i32
    %c0_i32_0 = arith.constant 0 : i32
    %c0_i32_1 = arith.constant 0 : i32
    return %c0_i32, %c0_i32_0 : i32, i32
  }
  func.func @transform_3(%arg0: i32) -> (i32, i32) {
    %c0_i32 = arith.constant 0 : i32
    %c0_i32_0 = arith.constant 0 : i32
    %c0_i32_1 = arith.constant 0 : i32
    return %c0_i32, %c0_i32_0 : i32, i32
  }
  func.func @transform_4(%arg0: i32) -> (i32, i32) {
    %c0_i32 = arith.constant 0 : i32
    %c0_i32_0 = arith.constant 0 : i32
    %c0_i32_1 = arith.constant 0 : i32
    return %c0_i32, %c0_i32_0 : i32, i32
  }
  func.func @transform_5(%arg0: i32) -> (i32, i32) {
    %c0_i32 = arith.constant 0 : i32
    %c0_i32_0 = arith.constant 0 : i32
    %c0_i32_1 = arith.constant 0 : i32
    return %c0_i32, %c0_i32_0 : i32, i32
  }
  func.func @transform_6(%arg0: i32) -> (i32, i32) {
    %c0_i32 = arith.constant 0 : i32
    %c0_i32_0 = arith.constant 0 : i32
    %c0_i32_1 = arith.constant 0 : i32
    return %c0_i32, %c0_i32_0 : i32, i32
  }
  func.func @transform_7(%arg0: i32) -> (i32, i32) {
    %c0_i32 = arith.constant 0 : i32
    %c0_i32_0 = arith.constant 0 : i32
    return %arg0, %c0_i32 : i32, i32
  }
}

module attributes {stable_mosaic.version = 11 : i64} {
  func.func @prednet_kernel(%arg0: i32, %arg1: memref<128x64xbf16, #tpu.memory_space<vmem>>, %arg2: memref<64x64xbf16, #tpu.memory_space<vmem>>, %arg3: memref<1x64xf32, #tpu.memory_space<vmem>>, %arg4: memref<64x32xbf16, #tpu.memory_space<vmem>>, %arg5: memref<1x32xf32, #tpu.memory_space<vmem>>, %arg6: memref<1x32xf32, #tpu.memory_space<vmem>>, %arg7: memref<1x1xf32, #tpu.memory_space<smem>>, %arg8: memref<128x1xf32, #tpu.memory_space<vmem>>) attributes {dimension_semantics = [#tpu.dimension_semantics<parallel>], iteration_bounds = array<i64: 1>, scalar_prefetch = 0 : i64, scratch_operands = 0 : i64, tpu.core_type = #tpu.core_type<tc>, window_params = [{transform_indices = @transform_0, window_bounds = array<i64: 128, 64>}, {pipeline_mode = #tpu.pipeline_mode<synchronous>, transform_indices = @transform_1, window_bounds = array<i64: 64, 64>}, {pipeline_mode = #tpu.pipeline_mode<synchronous>, transform_indices = @transform_2, window_bounds = array<i64: 1, 64>}, {pipeline_mode = #tpu.pipeline_mode<synchronous>, transform_indices = @transform_3, window_bounds = array<i64: 64, 32>}, {pipeline_mode = #tpu.pipeline_mode<synchronous>, transform_indices = @transform_4, window_bounds = array<i64: 1, 32>}, {pipeline_mode = #tpu.pipeline_mode<synchronous>, transform_indices = @transform_5, window_bounds = array<i64: 1, 32>}, {transform_indices = @transform_6, window_bounds = array<i64: 1, 1>}, {transform_indices = @transform_7, window_bounds = array<i64: 128, 1>}]} {
    %c0 = arith.constant 0 : index
    %c0_0 = arith.constant 0 : index
    %0 = vector.load %arg1[%c0, %c0_0] : memref<128x64xbf16, #tpu.memory_space<vmem>>, vector<128x64xbf16>
    %c0_1 = arith.constant 0 : index
    %c0_2 = arith.constant 0 : index
    %1 = vector.load %arg2[%c0_1, %c0_2] : memref<64x64xbf16, #tpu.memory_space<vmem>>, vector<64x64xbf16>
    %cst = arith.constant dense<0.000000e+00> : vector<128x64xf32>
    %2 = tpu.matmul %0, %1, %cst {dimension_numbers = #tpu.dot_dimension_numbers<[1], [0], [0], [1], [0, 0, 1, 1], [], []>} : vector<128x64xbf16>, vector<64x64xbf16>, vector<128x64xf32> -> vector<128x64xf32>
    %c0_3 = arith.constant 0 : index
    %c0_4 = arith.constant 0 : index
    %3 = vector.load %arg3[%c0_3, %c0_4] : memref<1x64xf32, #tpu.memory_space<vmem>>, vector<1x64xf32>
    %4 = vector.broadcast %3 : vector<1x64xf32> to vector<128x64xf32>
    %5 = arith.addf %2, %4 : vector<128x64xf32>
    %6 = arith.negf %5 : vector<128x64xf32>
    %7 = math.exp %6 : vector<128x64xf32>
    %cst_5 = arith.constant 1.000000e+00 : f32
    %8 = vector.broadcast %cst_5 : f32 to vector<128x64xf32>
    %9 = arith.addf %8, %7 : vector<128x64xf32>
    %10 = arith.divf %8, %9 : vector<128x64xf32>
    %11 = arith.truncf %10 : vector<128x64xf32> to vector<128x64xbf16>
    %c0_6 = arith.constant 0 : index
    %c0_7 = arith.constant 0 : index
    %12 = vector.load %arg4[%c0_6, %c0_7] : memref<64x32xbf16, #tpu.memory_space<vmem>>, vector<64x32xbf16>
    %cst_8 = arith.constant dense<0.000000e+00> : vector<128x32xf32>
    %13 = tpu.matmul %11, %12, %cst_8 {dimension_numbers = #tpu.dot_dimension_numbers<[1], [0], [0], [1], [0, 0, 1, 1], [], []>} : vector<128x64xbf16>, vector<64x32xbf16>, vector<128x32xf32> -> vector<128x32xf32>
    %c0_9 = arith.constant 0 : index
    %c0_10 = arith.constant 0 : index
    %14 = vector.load %arg5[%c0_9, %c0_10] : memref<1x32xf32, #tpu.memory_space<vmem>>, vector<1x32xf32>
    %15 = vector.broadcast %14 : vector<1x32xf32> to vector<128x32xf32>
    %16 = arith.addf %13, %15 : vector<128x32xf32>
    %17 = arith.negf %16 : vector<128x32xf32>
    %18 = math.exp %17 : vector<128x32xf32>
    %cst_11 = arith.constant 1.000000e+00 : f32
    %19 = vector.broadcast %cst_11 : f32 to vector<128x32xf32>
    %20 = arith.addf %19, %18 : vector<128x32xf32>
    %21 = arith.divf %19, %20 : vector<128x32xf32>
    %c0_12 = arith.constant 0 : index
    %c0_13 = arith.constant 0 : index
    %22 = vector.load %arg6[%c0_12, %c0_13] : memref<1x32xf32, #tpu.memory_space<vmem>>, vector<1x32xf32>
    %23 = vector.broadcast %22 : vector<1x32xf32> to vector<128x32xf32>
    %24 = arith.mulf %21, %23 : vector<128x32xf32>
    %cst_14 = arith.constant dense<0.000000e+00> : vector<128xf32>
    %25 = vector.multi_reduction <add>, %24, %cst_14 [1] : vector<128x32xf32> to vector<128xf32>
    %26 = vector.shape_cast %25 : vector<128xf32> to vector<128x1xf32>
    %c0_15 = arith.constant 0 : index
    %c0_16 = arith.constant 0 : index
    %27 = memref.load %arg7[%c0_15, %c0_16] : memref<1x1xf32, #tpu.memory_space<smem>>
    %28 = vector.broadcast %27 : f32 to vector<128x1xf32>
    %29 = arith.addf %26, %28 : vector<128x1xf32>
    %30 = arith.negf %29 : vector<128x1xf32>
    %31 = math.exp %30 : vector<128x1xf32>
    %cst_17 = arith.constant 1.000000e+00 : f32
    %32 = vector.broadcast %cst_17 : f32 to vector<128x1xf32>
    %33 = arith.addf %32, %31 : vector<128x1xf32>
    %34 = arith.divf %32, %33 : vector<128x1xf32>
    %c0_18 = arith.constant 0 : index
    %c0_19 = arith.constant 0 : index
    %35 = vector.load %arg8[%c0_18, %c0_19] : memref<128x1xf32, #tpu.memory_space<vmem>>, vector<128x1xf32>
    tpu.vector_store %arg8[%c0_18, %c0_19], %34 {strides = array<i32>} : memref<128x1xf32, #tpu.memory_space<vmem>>, vector<128x1xf32>,
    return
  }
  func.func @transform_0(%arg0: i32) -> (i32, i32) {
    %c0_i32 = arith.constant 0 : i32
    %c0_i32_0 = arith.constant 0 : i32
    return %arg0, %c0_i32 : i32, i32
  }
  func.func @transform_1(%arg0: i32) -> (i32, i32) {
    %c0_i32 = arith.constant 0 : i32
    %c0_i32_0 = arith.constant 0 : i32
    %c0_i32_1 = arith.constant 0 : i32
    return %c0_i32, %c0_i32_0 : i32, i32
  }
  func.func @transform_2(%arg0: i32) -> (i32, i32) {
    %c0_i32 = arith.constant 0 : i32
    %c0_i32_0 = arith.constant 0 : i32
    %c0_i32_1 = arith.constant 0 : i32
    return %c0_i32, %c0_i32_0 : i32, i32
  }
  func.func @transform_3(%arg0: i32) -> (i32, i32) {
    %c0_i32 = arith.constant 0 : i32
    %c0_i32_0 = arith.constant 0 : i32
    %c0_i32_1 = arith.constant 0 : i32
    return %c0_i32, %c0_i32_0 : i32, i32
  }
  func.func @transform_4(%arg0: i32) -> (i32, i32) {
    %c0_i32 = arith.constant 0 : i32
    %c0_i32_0 = arith.constant 0 : i32
    %c0_i32_1 = arith.constant 0 : i32
    return %c0_i32, %c0_i32_0 : i32, i32
  }
  func.func @transform_5(%arg0: i32) -> (i32, i32) {
    %c0_i32 = arith.constant 0 : i32
    %c0_i32_0 = arith.constant 0 : i32
    %c0_i32_1 = arith.constant 0 : i32
    return %c0_i32, %c0_i32_0 : i32, i32
  }
  func.func @transform_6(%arg0: i32) -> (i32, i32) {
    %c0_i32 = arith.constant 0 : i32
    %c0_i32_0 = arith.constant 0 : i32
    %c0_i32_1 = arith.constant 0 : i32
    return %c0_i32, %c0_i32_0 : i32, i32
  }
  func.func @transform_7(%arg0: i32) -> (i32, i32) {
    %c0_i32 = arith.constant 0 : i32
    %c0_i32_0 = arith.constant 0 : i32
    return %arg0, %c0_i32 : i32, i32
  }
}

</mosaic_0001>

<llo_original>
// kernel: tpu_custom_call.1
$region0: #{tpu_custom_call.1}
  #allocation0 [shape = 'u32[]', space=smem, size = 0x4, offset = 0x4, fixed_abs, tag = 'smem constant byte address 0x4 - core index']
  #allocation1 [shape = 'u32[144,128]{1,0:T(1,128)}', space=vmem, size = 0x12000, scoped, tag = 'internal scratch']
  #allocation2 [shape = 'f32[1,1]{1,0:T(1,128)S(6)}', space=smem, size = 0x200, scoped, tag = 'scoped memory for tpu_custom_call.1']
  %s0 = inlined_call_operand.vmem [shape: bf16[128,64], index: 0, kind: input, shape index: {}]
  %s1 = inlined_call_operand.vmem [shape: bf16[64,64], index: 1, kind: input, shape index: {}]
  %s2 = inlined_call_operand.vmem [shape: f32[1,64], index: 2, kind: input, shape index: {}]
  %s3 = inlined_call_operand.vmem [shape: bf16[64,32], index: 3, kind: input, shape index: {}]
  %s4 = inlined_call_operand.vmem [shape: f32[1,32], index: 4, kind: input, shape index: {}]
  %s5 = inlined_call_operand.vmem [shape: f32[1,32], index: 5, kind: input, shape index: {}]
  %s6 = inlined_call_operand.<no memory space> [shape: f32[1,1], index: 6, kind: input, shape index: {}]
  %s7 = inlined_call_operand.vmem [shape: f32[128,1], index: 7, kind: output, shape index: {}]
  %s8 = sld [smem:[#allocation0]]
  $region38: #{tpu_custom_call.1} parent=0
    _
  %s10 = ssub.s32 1, %s8
  %s11 = scalar_select 0, %s10, %s8
  %12 = sst [smem:[#allocation2]] %s6
  // Predicated region
  $region2: #{tpu_custom_call.1} parent=0 // pred_check
    _
  $region3: #{tpu_custom_call.1} parent=0 // pred_check_branch
    %14 = sbr.rel (0) target = $region5
  $region4: #{tpu_custom_call.1} parent=0 // pred_region
    _
  $region5: #{tpu_custom_call.1} parent=0 // pred_fallthru
    _
  // Predicated region
  $region6: #{tpu_custom_call.1} parent=0 // pred_check
    _
  $region7: #{tpu_custom_call.1} parent=0 // pred_check_branch
    %16 = sbr.rel (0) target = $region9
  $region8: #{tpu_custom_call.1} parent=0 // pred_region
    _
  $region9: #{tpu_custom_call.1} parent=0 // pred_fallthru
    _
  // Predicated region
  $region10: #{tpu_custom_call.1} parent=0 // pred_check
    _
  $region11: #{tpu_custom_call.1} parent=0 // pred_check_branch
    %18 = sbr.rel (0) target = $region13
  $region12: #{tpu_custom_call.1} parent=0 // pred_region
    _
  $region13: #{tpu_custom_call.1} parent=0 // pred_fallthru
    _
  // Predicated region
  $region14: #{tpu_custom_call.1} parent=0 // pred_check
    _
  $region15: #{tpu_custom_call.1} parent=0 // pred_check_branch
    %20 = sbr.rel (0) target = $region17
  $region16: #{tpu_custom_call.1} parent=0 // pred_region
    _
  $region17: #{tpu_custom_call.1} parent=0 // pred_fallthru
    _
  // Predicated region
  $region18: #{tpu_custom_call.1} parent=0 // pred_check
    _
  $region19: #{tpu_custom_call.1} parent=0 // pred_check_branch
    %22 = sbr.rel (0) target = $region21
  $region20: #{tpu_custom_call.1} parent=0 // pred_region
    _
  $region21: #{tpu_custom_call.1} parent=0 // pred_fallthru
    _
  // Predicated region
  $region22: #{tpu_custom_call.1} parent=0 // pred_check
    _
  $region23: #{tpu_custom_call.1} parent=0 // pred_check_branch
    %24 = sbr.rel (0) target = $region25
  $region24: #{tpu_custom_call.1} parent=0 // pred_region
    _
  $region25: #{tpu_custom_call.1} parent=0 // pred_fallthru
    _
  // Predicated region
  $region26: #{tpu_custom_call.1} parent=0 // pred_check
    _
  $region27: #{tpu_custom_call.1} parent=0 // pred_check_branch
    %26 = sbr.rel (0) target = $region29
  $region28: #{tpu_custom_call.1} parent=0 // pred_region
    _
  $region29: #{tpu_custom_call.1} parent=0 // pred_fallthru
    _
  %v28 = vld [vmem:[%s0] sm:$0xf]
  %v29 = vld [vmem:[%s0 + $0x4] sm:$0xf]
  %v30 = vld [vmem:[%s0 + $0x8] sm:$0xf]
  %v31 = vld [vmem:[%s0 + $0xc] sm:$0xf]
  %v32 = vld [vmem:[%s0 + $0x10] sm:$0xf]
  %v33 = vld [vmem:[%s0 + $0x14] sm:$0xf]
  %v34 = vld [vmem:[%s0 + $0x18] sm:$0xf]
  %v35 = vld [vmem:[%s0 + $0x1c] sm:$0xf]
  %v36 = vld [vmem:[%s0 + $0x20] sm:$0xf]
  %v37 = vld [vmem:[%s0 + $0x24] sm:$0xf]
  %v38 = vld [vmem:[%s0 + $0x28] sm:$0xf]
  %v39 = vld [vmem:[%s0 + $0x2c] sm:$0xf]
  %v40 = vld [vmem:[%s0 + $0x30] sm:$0xf]
  %v41 = vld [vmem:[%s0 + $0x34] sm:$0xf]
  %v42 = vld [vmem:[%s0 + $0x38] sm:$0xf]
  %v43 = vld [vmem:[%s0 + $0x3c] sm:$0xf]
  %v44 = vld [vmem:[%s1] sm:$0xf]
  %v45 = vld [vmem:[%s1 + $0x4] sm:$0xf]
  %v46 = vld [vmem:[%s1 + $0x8] sm:$0xf]
  %v47 = vld [vmem:[%s1 + $0xc] sm:$0xf]
  %v48 = vld [vmem:[%s1 + $0x10] sm:$0xf]
  %v49 = vld [vmem:[%s1 + $0x14] sm:$0xf]
  %v50 = vld [vmem:[%s1 + $0x18] sm:$0xf]
  %v51 = vld [vmem:[%s1 + $0x1c] sm:$0xf]
  %v52 = vld [vmem:[%s2] sm:$0x1]
  %v54 = vlaneseq
  %v55 = vshrl.u32 %v54, 7
  %v56 = vsub.s32 0, %v55
  %v57 = vrot.slane %v52, %v56
  %v75 = vunpack.c.l.b16 %v28
  %v76 = vunpack.c.l.b16 %v29
  %v77 = vunpack.c.l.b16 %v30
  %v78 = vunpack.c.l.b16 %v31
  %v79 = vunpack.c.l.b16 %v32
  %v80 = vunpack.c.l.b16 %v33
  %v81 = vunpack.c.l.b16 %v34
  %v82 = vunpack.c.l.b16 %v35
  %v83 = vunpack.c.l.b16 %v36
  %v84 = vunpack.c.l.b16 %v37
  %v85 = vunpack.c.l.b16 %v38
  %v86 = vunpack.c.l.b16 %v39
  %v87 = vunpack.c.l.b16 %v40
  %v88 = vunpack.c.l.b16 %v41
  %v89 = vunpack.c.l.b16 %v42
  %v90 = vunpack.c.l.b16 %v43
  %v91 = vpack.c.b16 %v76, %v75
  %v92 = vpack.c.b16 %v78, %v77
  %v93 = vpack.c.b16 %v80, %v79
  %v94 = vpack.c.b16 %v82, %v81
  %v95 = vpack.c.b16 %v84, %v83
  %v96 = vpack.c.b16 %v86, %v85
  %v97 = vpack.c.b16 %v88, %v87
  %v98 = vpack.c.b16 %v90, %v89
  %v107 = vunpack.c.l.b16 %v44
  %v108 = vunpack.c.l.b16 %v45
  %v109 = vunpack.c.l.b16 %v46
  %v110 = vunpack.c.l.b16 %v47
  %v111 = vunpack.c.l.b16 %v48
  %v112 = vunpack.c.l.b16 %v49
  %v113 = vunpack.c.l.b16 %v50
  %v114 = vunpack.c.l.b16 %v51
  %v115 = vpack.c.b16 %v108, %v107
  %v116 = vpack.c.b16 %v110, %v109
  %v117 = vpack.c.b16 %v112, %v111
  %v118 = vpack.c.b16 %v114, %v113
  %vm123 = vcmask 523264
  %v125 = vsel %vm123, %v91, 0
  %v128 = vsel %vm123, %v92, 0
  %v131 = vsel %vm123, %v93, 0
  %v134 = vsel %vm123, %v94, 0
  %v137 = vsel %vm123, %v95, 0
  %v140 = vsel %vm123, %v96, 0
  %v143 = vsel %vm123, %v97, 0
  %v146 = vsel %vm123, %v98, 0
  %148 = vmatprep.subr.bf16.mxu0 0
  %149 = vmatpush1.bf16.msra.mxu0 %v115
  %150 = vmatprep.subr.bf16.mxu0 0
  %151 = vmatpush1.bf16.msra.mxu0 %v116
  %152 = vmatprep.subr.bf16.mxu0 0
  %153 = vmatpush1.bf16.msra.mxu0 %v117
  %154 = vmatprep.subr.bf16.mxu0 0
  %155 = vmatpush1.bf16.msra.mxu0 %v118
  %156 = vmatprep.subr.bf16.mxu0 0
  %157 = vmatpush1.bf16.msra.mxu0 0
  %158 = vmatprep.subr.bf16.mxu0 0
  %159 = vmatpush1.bf16.msra.mxu0 0
  %160 = vmatprep.subr.bf16.mxu0 0
  %161 = vmatpush1.bf16.msra.mxu0 0
  %162 = vmatprep.subr.bf16.mxu0 0
  %163 = vmatpush1.bf16.msra.mxu0 0
  %164 = vmatprep.subr.bf16.mxu0 0
  %165 = vmatpush1.bf16.msra.mxu0 0
  %166 = vmatprep.subr.bf16.mxu0 0
  %167 = vmatpush1.bf16.msra.mxu0 0
  %168 = vmatprep.subr.bf16.mxu0 0
  %169 = vmatpush1.bf16.msra.mxu0 0
  %170 = vmatprep.subr.bf16.mxu0 0
  %171 = vmatpush1.bf16.msra.mxu0 0
  %172 = vmatprep.subr.bf16.mxu0 0
  %173 = vmatpush1.bf16.msra.mxu0 0
  %174 = vmatprep.subr.bf16.mxu0 0
  %175 = vmatpush1.bf16.msra.mxu0 0
  %176 = vmatprep.subr.bf16.mxu0 0
  %177 = vmatpush1.bf16.msra.mxu0 0
  %178 = vmatprep.subr.bf16.mxu0 0
  %179 = vmatpush1.bf16.msra.mxu0 0
  %180 = vmatprep.mubr.bf16.mxu0 0
  %181 = vmatmul.mubr.bf16.gmra.mrb[0].mxu0 %v125
  %v182 = vpop.f32.mrb[0].mxu0
  %v183 = vadd.f32 %v57, %v182
  %v184 = vpop.f32.mrb[0].mxu0
  %v185 = vpop.f32.mrb[0].mxu0
  %v186 = vadd.f32 %v57, %v185
  %v187 = vpop.f32.mrb[0].mxu0
  %188 = vmatprep.mubr.bf16.mxu0 0
  %189 = vmatmul.mubr.bf16.gmra.mrb[0].mxu0 %v128
  %v190 = vpop.f32.mrb[0].mxu0
  %v191 = vadd.f32 %v57, %v190
  %v192 = vpop.f32.mrb[0].mxu0
  %v193 = vpop.f32.mrb[0].mxu0
  %v194 = vadd.f32 %v57, %v193
  %v195 = vpop.f32.mrb[0].mxu0
  %196 = vmatprep.mubr.bf16.mxu0 0
  %197 = vmatmul.mubr.bf16.gmra.mrb[0].mxu0 %v131
  %v198 = vpop.f32.mrb[0].mxu0
  %v199 = vadd.f32 %v57, %v198
  %v200 = vpop.f32.mrb[0].mxu0
  %v201 = vpop.f32.mrb[0].mxu0
  %v202 = vadd.f32 %v57, %v201
  %v203 = vpop.f32.mrb[0].mxu0
  %204 = vmatprep.mubr.bf16.mxu0 0
  %205 = vmatmul.mubr.bf16.gmra.mrb[0].mxu0 %v134
  %v206 = vpop.f32.mrb[0].mxu0
  %v207 = vadd.f32 %v57, %v206
  %v208 = vpop.f32.mrb[0].mxu0
  %v209 = vpop.f32.mrb[0].mxu0
  %v210 = vadd.f32 %v57, %v209
  %v211 = vpop.f32.mrb[0].mxu0
  %212 = vmatprep.mubr.bf16.mxu0 0
  %213 = vmatmul.mubr.bf16.gmra.mrb[0].mxu0 %v137
  %v214 = vpop.f32.mrb[0].mxu0
  %v215 = vadd.f32 %v57, %v214
  %v216 = vpop.f32.mrb[0].mxu0
  %v217 = vpop.f32.mrb[0].mxu0
  %v218 = vadd.f32 %v57, %v217
  %v219 = vpop.f32.mrb[0].mxu0
  %220 = vmatprep.mubr.bf16.mxu0 0
  %221 = vmatmul.mubr.bf16.gmra.mrb[0].mxu0 %v140
  %v222 = vpop.f32.mrb[0].mxu0
  %v223 = vadd.f32 %v57, %v222
  %v224 = vpop.f32.mrb[0].mxu0
  %v225 = vpop.f32.mrb[0].mxu0
  %v226 = vadd.f32 %v57, %v225
  %v227 = vpop.f32.mrb[0].mxu0
  %228 = vmatprep.mubr.bf16.mxu0 0
  %229 = vmatmul.mubr.bf16.gmra.mrb[0].mxu0 %v143
  %v230 = vpop.f32.mrb[0].mxu0
  %v231 = vadd.f32 %v57, %v230
  %v232 = vpop.f32.mrb[0].mxu0
  %v233 = vpop.f32.mrb[0].mxu0
  %v234 = vadd.f32 %v57, %v233
  %v235 = vpop.f32.mrb[0].mxu0
  %236 = vmatprep.mubr.bf16.mxu0 0
  %237 = vmatmul.mubr.bf16.gmra.mrb[0].mxu0 %v146
  %v238 = vpop.f32.mrb[0].mxu0
  %v239 = vadd.f32 %v57, %v238
  %v240 = vpop.f32.mrb[0].mxu0
  %v241 = vpop.f32.mrb[0].mxu0
  %v242 = vadd.f32 %v57, %v241
  %v243 = vpop.f32.mrb[0].mxu0
  %244 = vdwg.mxu0
  %v245 = vxor.u32 %v183, 2147483648
  %v246 = vxor.u32 %v186, 2147483648
  %v247 = vxor.u32 %v191, 2147483648
  %v248 = vxor.u32 %v194, 2147483648
  %v249 = vxor.u32 %v199, 2147483648
  %v250 = vxor.u32 %v202, 2147483648
  %v251 = vxor.u32 %v207, 2147483648
  %v252 = vxor.u32 %v210, 2147483648
  %v253 = vxor.u32 %v215, 2147483648
  %v254 = vxor.u32 %v218, 2147483648
  %v255 = vxor.u32 %v223, 2147483648
  %v256 = vxor.u32 %v226, 2147483648
  %v257 = vxor.u32 %v231, 2147483648
  %v258 = vxor.u32 %v234, 2147483648
  %v259 = vxor.u32 %v239, 2147483648
  %v260 = vxor.u32 %v242, 2147483648
  %v261 = vmul.f32 %v245, 1.442695
  %v262 = vpow.pop %v261
  %v263 = vmul.f32 %v246, 1.442695
  %v264 = vpow.pop %v263
  %v265 = vmul.f32 %v247, 1.442695
  %v266 = vpow.pop %v265
  %v267 = vmul.f32 %v248, 1.442695
  %v268 = vpow.pop %v267
  %v269 = vmul.f32 %v249, 1.442695
  %v270 = vpow.pop %v269
  %v271 = vmul.f32 %v250, 1.442695
  %v272 = vpow.pop %v271
  %v273 = vmul.f32 %v251, 1.442695
  %v274 = vpow.pop %v273
  %v275 = vmul.f32 %v252, 1.442695
  %v276 = vpow.pop %v275
  %v277 = vmul.f32 %v253, 1.442695
  %v278 = vpow.pop %v277
  %v279 = vmul.f32 %v254, 1.442695
  %v280 = vpow.pop %v279
  %v281 = vmul.f32 %v255, 1.442695
  %v282 = vpow.pop %v281
  %v283 = vmul.f32 %v256, 1.442695
  %v284 = vpow.pop %v283
  %v285 = vmul.f32 %v257, 1.442695
  %v286 = vpow.pop %v285
  %v287 = vmul.f32 %v258, 1.442695
  %v288 = vpow.pop %v287
  %v289 = vmul.f32 %v259, 1.442695
  %v290 = vpow.pop %v289
  %v291 = vmul.f32 %v260, 1.442695
  %v292 = vpow.pop %v291
  %v293 = vadd.f32 %v262, 1.0
  %v294 = vadd.f32 %v264, 1.0
  %v295 = vadd.f32 %v266, 1.0
  %v296 = vadd.f32 %v268, 1.0
  %v297 = vadd.f32 %v270, 1.0
  %v298 = vadd.f32 %v272, 1.0
  %v299 = vadd.f32 %v274, 1.0
  %v300 = vadd.f32 %v276, 1.0
  %v301 = vadd.f32 %v278, 1.0
  %v302 = vadd.f32 %v280, 1.0
  %v303 = vadd.f32 %v282, 1.0
  %v304 = vadd.f32 %v284, 1.0
  %v305 = vadd.f32 %v286, 1.0
  %v306 = vadd.f32 %v288, 1.0
  %v307 = vadd.f32 %v290, 1.0
  %v308 = vadd.f32 %v292, 1.0
  %v309 = vrcp.pop %v293
  %v310 = vmul.f32 1.0, %v309
  %v311 = vrcp.pop %v294
  %v312 = vmul.f32 1.0, %v311
  %v313 = vrcp.pop %v295
  %v314 = vmul.f32 1.0, %v313
  %v315 = vrcp.pop %v296
  %v316 = vmul.f32 1.0, %v315
  %v317 = vrcp.pop %v297
  %v318 = vmul.f32 1.0, %v317
  %v319 = vrcp.pop %v298
  %v320 = vmul.f32 1.0, %v319
  %v321 = vrcp.pop %v299
  %v322 = vmul.f32 1.0, %v321
  %v323 = vrcp.pop %v300
  %v324 = vmul.f32 1.0, %v323
  %v325 = vrcp.pop %v301
  %v326 = vmul.f32 1.0, %v325
  %v327 = vrcp.pop %v302
  %v328 = vmul.f32 1.0, %v327
  %v329 = vrcp.pop %v303
  %v330 = vmul.f32 1.0, %v329
  %v331 = vrcp.pop %v304
  %v332 = vmul.f32 1.0, %v331
  %v333 = vrcp.pop %v305
  %v334 = vmul.f32 1.0, %v333
  %v335 = vrcp.pop %v306
  %v336 = vmul.f32 1.0, %v335
  %v337 = vrcp.pop %v307
  %v338 = vmul.f32 1.0, %v337
  %v339 = vrcp.pop %v308
  %v340 = vmul.f32 1.0, %v339
  %v341 = vpack.c.bf16 %v312, %v310
  %v342 = vpack.c.bf16 %v316, %v314
  %v343 = vpack.c.bf16 %v320, %v318
  %v344 = vpack.c.bf16 %v324, %v322
  %v345 = vpack.c.bf16 %v328, %v326
  %v346 = vpack.c.bf16 %v332, %v330
  %v347 = vpack.c.bf16 %v336, %v334
  %v348 = vpack.c.bf16 %v340, %v338
  %v349 = vld [vmem:[%s3] sm:$0xf]
  %v350 = vld [vmem:[%s3 + $0x4] sm:$0xf]
  %v351 = vld [vmem:[%s3 + $0x8] sm:$0xf]
  %v352 = vld [vmem:[%s3 + $0xc] sm:$0xf]
  %v353 = vld [vmem:[%s3 + $0x10] sm:$0xf]
  %v354 = vld [vmem:[%s3 + $0x14] sm:$0xf]
  %v355 = vld [vmem:[%s3 + $0x18] sm:$0xf]
  %v356 = vld [vmem:[%s3 + $0x1c] sm:$0xf]
  %v357 = vld [vmem:[%s4] sm:$0x1]
  %v359 = vlaneseq
  %v360 = vshrl.u32 %v359, 7
  %v361 = vsub.s32 0, %v360
  %v362 = vrot.slane %v357, %v361
  %v372 = vunpack.c.l.b16 %v349
  %v373 = vunpack.c.l.b16 %v350
  %v374 = vunpack.c.l.b16 %v351
  %v375 = vunpack.c.l.b16 %v352
  %v376 = vunpack.c.l.b16 %v353
  %v377 = vunpack.c.l.b16 %v354
  %v378 = vunpack.c.l.b16 %v355
  %v379 = vunpack.c.l.b16 %v356
  %v380 = vpack.c.b16 %v373, %v372
  %v381 = vpack.c.b16 %v375, %v374
  %v382 = vpack.c.b16 %v377, %v376
  %v383 = vpack.c.b16 %v379, %v378
  %v389 = vsel %vm123, %v341, 0
  %v392 = vsel %vm123, %v342, 0
  %v395 = vsel %vm123, %v343, 0
  %v398 = vsel %vm123, %v344, 0
  %v401 = vsel %vm123, %v345, 0
  %v404 = vsel %vm123, %v346, 0
  %v407 = vsel %vm123, %v347, 0
  %v410 = vsel %vm123, %v348, 0
  %412 = vmatprep.subr.bf16.mxu0 0
  %413 = vmatpush1.bf16.msra.mxu0 %v380
  %414 = vmatprep.subr.bf16.mxu0 0
  %415 = vmatpush1.bf16.msra.mxu0 %v381
  %416 = vmatprep.subr.bf16.mxu0 0
  %417 = vmatpush1.bf16.msra.mxu0 %v382
  %418 = vmatprep.subr.bf16.mxu0 0
  %419 = vmatpush1.bf16.msra.mxu0 %v383
  %420 = vmatprep.subr.bf16.mxu0 0
  %421 = vmatpush1.bf16.msra.mxu0 0
  %422 = vmatprep.subr.bf16.mxu0 0
  %423 = vmatpush1.bf16.msra.mxu0 0
  %424 = vmatprep.subr.bf16.mxu0 0
  %425 = vmatpush1.bf16.msra.mxu0 0
  %426 = vmatprep.subr.bf16.mxu0 0
  %427 = vmatpush1.bf16.msra.mxu0 0
  %428 = vmatprep.subr.bf16.mxu0 0
  %429 = vmatpush1.bf16.msra.mxu0 0
  %430 = vmatprep.subr.bf16.mxu0 0
  %431 = vmatpush1.bf16.msra.mxu0 0
  %432 = vmatprep.subr.bf16.mxu0 0
  %433 = vmatpush1.bf16.msra.mxu0 0
  %434 = vmatprep.subr.bf16.mxu0 0
  %435 = vmatpush1.bf16.msra.mxu0 0
  %436 = vmatprep.subr.bf16.mxu0 0
  %437 = vmatpush1.bf16.msra.mxu0 0
  %438 = vmatprep.subr.bf16.mxu0 0
  %439 = vmatpush1.bf16.msra.mxu0 0
  %440 = vmatprep.subr.bf16.mxu0 0
  %441 = vmatpush1.bf16.msra.mxu0 0
  %442 = vmatprep.subr.bf16.mxu0 0
  %443 = vmatpush1.bf16.msra.mxu0 0
  %444 = vmatprep.mubr.bf16.mxu0 0
  %445 = vmatmul.mubr.bf16.gmra.mrb[0].mxu0 %v389
  %v446 = vpop.f32.mrb[0].mxu0
  %v447 = vadd.f32 %v362, %v446
  %v448 = vpop.f32.mrb[0].mxu0
  %v449 = vpop.f32.mrb[0].mxu0
  %v450 = vadd.f32 %v362, %v449
  %v451 = vpop.f32.mrb[0].mxu0
  %452 = vmatprep.mubr.bf16.mxu0 0
  %453 = vmatmul.mubr.bf16.gmra.mrb[0].mxu0 %v392
  %v454 = vpop.f32.mrb[0].mxu0
  %v455 = vadd.f32 %v362, %v454
  %v456 = vpop.f32.mrb[0].mxu0
  %v457 = vpop.f32.mrb[0].mxu0
  %v458 = vadd.f32 %v362, %v457
  %v459 = vpop.f32.mrb[0].mxu0
  %460 = vmatprep.mubr.bf16.mxu0 0
  %461 = vmatmul.mubr.bf16.gmra.mrb[0].mxu0 %v395
  %v462 = vpop.f32.mrb[0].mxu0
  %v463 = vadd.f32 %v362, %v462
  %v464 = vpop.f32.mrb[0].mxu0
  %v465 = vpop.f32.mrb[0].mxu0
  %v466 = vadd.f32 %v362, %v465
  %v467 = vpop.f32.mrb[0].mxu0
  %468 = vmatprep.mubr.bf16.mxu0 0
  %469 = vmatmul.mubr.bf16.gmra.mrb[0].mxu0 %v398
  %v470 = vpop.f32.mrb[0].mxu0
  %v471 = vadd.f32 %v362, %v470
  %v472 = vpop.f32.mrb[0].mxu0
  %v473 = vpop.f32.mrb[0].mxu0
  %v474 = vadd.f32 %v362, %v473
  %v475 = vpop.f32.mrb[0].mxu0
  %476 = vmatprep.mubr.bf16.mxu0 0
  %477 = vmatmul.mubr.bf16.gmra.mrb[0].mxu0 %v401
  %v478 = vpop.f32.mrb[0].mxu0
  %v479 = vadd.f32 %v362, %v478
  %v480 = vpop.f32.mrb[0].mxu0
  %v481 = vpop.f32.mrb[0].mxu0
  %v482 = vadd.f32 %v362, %v481
  %v483 = vpop.f32.mrb[0].mxu0
  %484 = vmatprep.mubr.bf16.mxu0 0
  %485 = vmatmul.mubr.bf16.gmra.mrb[0].mxu0 %v404
  %v486 = vpop.f32.mrb[0].mxu0
  %v487 = vadd.f32 %v362, %v486
  %v488 = vpop.f32.mrb[0].mxu0
  %v489 = vpop.f32.mrb[0].mxu0
  %v490 = vadd.f32 %v362, %v489
  %v491 = vpop.f32.mrb[0].mxu0
  %492 = vmatprep.mubr.bf16.mxu0 0
  %493 = vmatmul.mubr.bf16.gmra.mrb[0].mxu0 %v407
  %v494 = vpop.f32.mrb[0].mxu0
  %v495 = vadd.f32 %v362, %v494
  %v496 = vpop.f32.mrb[0].mxu0
  %v497 = vpop.f32.mrb[0].mxu0
  %v498 = vadd.f32 %v362, %v497
  %v499 = vpop.f32.mrb[0].mxu0
  %500 = vmatprep.mubr.bf16.mxu0 0
  %501 = vmatmul.mubr.bf16.gmra.mrb[0].mxu0 %v410
  %v502 = vpop.f32.mrb[0].mxu0
  %v503 = vadd.f32 %v362, %v502
  %v504 = vpop.f32.mrb[0].mxu0
  %v505 = vpop.f32.mrb[0].mxu0
  %v506 = vadd.f32 %v362, %v505
  %v507 = vpop.f32.mrb[0].mxu0
  %508 = vdwg.mxu0
  %v509 = vxor.u32 %v447, 2147483648
  %v510 = vxor.u32 %v450, 2147483648
  %v511 = vxor.u32 %v455, 2147483648
  %v512 = vxor.u32 %v458, 2147483648
  %v513 = vxor.u32 %v463, 2147483648
  %v514 = vxor.u32 %v466, 2147483648
  %v515 = vxor.u32 %v471, 2147483648
  %v516 = vxor.u32 %v474, 2147483648
  %v517 = vxor.u32 %v479, 2147483648
  %v518 = vxor.u32 %v482, 2147483648
  %v519 = vxor.u32 %v487, 2147483648
  %v520 = vxor.u32 %v490, 2147483648
  %v521 = vxor.u32 %v495, 2147483648
  %v522 = vxor.u32 %v498, 2147483648
  %v523 = vxor.u32 %v503, 2147483648
  %v524 = vxor.u32 %v506, 2147483648
  %v525 = vmul.f32 %v509, 1.442695
  %v526 = vpow.pop %v525
  %v527 = vmul.f32 %v510, 1.442695
  %v528 = vpow.pop %v527
  %v529 = vmul.f32 %v511, 1.442695
  %v530 = vpow.pop %v529
  %v531 = vmul.f32 %v512, 1.442695
  %v532 = vpow.pop %v531
  %v533 = vmul.f32 %v513, 1.442695
  %v534 = vpow.pop %v533
  %v535 = vmul.f32 %v514, 1.442695
  %v536 = vpow.pop %v535
  %v537 = vmul.f32 %v515, 1.442695
  %v538 = vpow.pop %v537
  %v539 = vmul.f32 %v516, 1.442695
  %v540 = vpow.pop %v539
  %v541 = vmul.f32 %v517, 1.442695
  %v542 = vpow.pop %v541
  %v543 = vmul.f32 %v518, 1.442695
  %v544 = vpow.pop %v543
  %v545 = vmul.f32 %v519, 1.442695
  %v546 = vpow.pop %v545
  %v547 = vmul.f32 %v520, 1.442695
  %v548 = vpow.pop %v547
  %v549 = vmul.f32 %v521, 1.442695
  %v550 = vpow.pop %v549
  %v551 = vmul.f32 %v522, 1.442695
  %v552 = vpow.pop %v551
  %v553 = vmul.f32 %v523, 1.442695
  %v554 = vpow.pop %v553
  %v555 = vmul.f32 %v524, 1.442695
  %v556 = vpow.pop %v555
  %v557 = vadd.f32 %v526, 1.0
  %v558 = vadd.f32 %v528, 1.0
  %v559 = vadd.f32 %v530, 1.0
  %v560 = vadd.f32 %v532, 1.0
  %v561 = vadd.f32 %v534, 1.0
  %v562 = vadd.f32 %v536, 1.0
  %v563 = vadd.f32 %v538, 1.0
  %v564 = vadd.f32 %v540, 1.0
  %v565 = vadd.f32 %v542, 1.0
  %v566 = vadd.f32 %v544, 1.0
  %v567 = vadd.f32 %v546, 1.0
  %v568 = vadd.f32 %v548, 1.0
  %v569 = vadd.f32 %v550, 1.0
  %v570 = vadd.f32 %v552, 1.0
  %v571 = vadd.f32 %v554, 1.0
  %v572 = vadd.f32 %v556, 1.0
  %v573 = vrcp.pop %v557
  %v574 = vmul.f32 1.0, %v573
  %v575 = vrcp.pop %v558
  %v576 = vmul.f32 1.0, %v575
  %v577 = vrcp.pop %v559
  %v578 = vmul.f32 1.0, %v577
  %v579 = vrcp.pop %v560
  %v580 = vmul.f32 1.0, %v579
  %v581 = vrcp.pop %v561
  %v582 = vmul.f32 1.0, %v581
  %v583 = vrcp.pop %v562
  %v584 = vmul.f32 1.0, %v583
  %v585 = vrcp.pop %v563
  %v586 = vmul.f32 1.0, %v585
  %v587 = vrcp.pop %v564
  %v588 = vmul.f32 1.0, %v587
  %v589 = vrcp.pop %v565
  %v590 = vmul.f32 1.0, %v589
  %v591 = vrcp.pop %v566
  %v592 = vmul.f32 1.0, %v591
  %v593 = vrcp.pop %v567
  %v594 = vmul.f32 1.0, %v593
  %v595 = vrcp.pop %v568
  %v596 = vmul.f32 1.0, %v595
  %v597 = vrcp.pop %v569
  %v598 = vmul.f32 1.0, %v597
  %v599 = vrcp.pop %v570
  %v600 = vmul.f32 1.0, %v599
  %v601 = vrcp.pop %v571
  %v602 = vmul.f32 1.0, %v601
  %v603 = vrcp.pop %v572
  %v604 = vmul.f32 1.0, %v603
  %v605 = vld [vmem:[%s5] sm:$0x1]
  %v607 = vlaneseq
  %v608 = vshrl.u32 %v607, 7
  %v609 = vsub.s32 0, %v608
  %v610 = vrot.slane %v605, %v609
  %v612 = vmul.f32 %v574, %v610
  %v613 = vmul.f32 %v576, %v610
  %v614 = vmul.f32 %v578, %v610
  %v615 = vmul.f32 %v580, %v610
  %v616 = vmul.f32 %v582, %v610
  %v617 = vmul.f32 %v584, %v610
  %v618 = vmul.f32 %v586, %v610
  %v619 = vmul.f32 %v588, %v610
  %v620 = vmul.f32 %v590, %v610
  %v621 = vmul.f32 %v592, %v610
  %v622 = vmul.f32 %v594, %v610
  %v623 = vmul.f32 %v596, %v610
  %v624 = vmul.f32 %v598, %v610
  %v625 = vmul.f32 %v600, %v610
  %v626 = vmul.f32 %v602, %v610
  %v627 = vmul.f32 %v604, %v610
  %vm628 = vcmask 261120
  %v629 = vsel %vm628, %v612, 0.0
  %630 = vadd.xlane.f32.xlu0 %v629
  %v631 = vpop.xlane.xlu0 %630
  %v632 = vsel %vm628, %v613, 0.0
  %633 = vadd.xlane.f32.xlu0 %v632
  %v634 = vpop.xlane.xlu0 %633
  %v635 = vsel %vm628, %v614, 0.0
  %636 = vadd.xlane.f32.xlu0 %v635
  %v637 = vpop.xlane.xlu0 %636
  %v638 = vsel %vm628, %v615, 0.0
  %639 = vadd.xlane.f32.xlu0 %v638
  %v640 = vpop.xlane.xlu0 %639
  %v641 = vsel %vm628, %v616, 0.0
  %642 = vadd.xlane.f32.xlu0 %v641
  %v643 = vpop.xlane.xlu0 %642
  %v644 = vsel %vm628, %v617, 0.0
  %645 = vadd.xlane.f32.xlu0 %v644
  %v646 = vpop.xlane.xlu0 %645
  %v647 = vsel %vm628, %v618, 0.0
  %648 = vadd.xlane.f32.xlu0 %v647
  %v649 = vpop.xlane.xlu0 %648
  %v650 = vsel %vm628, %v619, 0.0
  %651 = vadd.xlane.f32.xlu0 %v650
  %v652 = vpop.xlane.xlu0 %651
  %v653 = vsel %vm628, %v620, 0.0
  %654 = vadd.xlane.f32.xlu0 %v653
  %v655 = vpop.xlane.xlu0 %654
  %v656 = vsel %vm628, %v621, 0.0
  %657 = vadd.xlane.f32.xlu0 %v656
  %v658 = vpop.xlane.xlu0 %657
  %v659 = vsel %vm628, %v622, 0.0
  %660 = vadd.xlane.f32.xlu0 %v659
  %v661 = vpop.xlane.xlu0 %660
  %v662 = vsel %vm628, %v623, 0.0
  %663 = vadd.xlane.f32.xlu0 %v662
  %v664 = vpop.xlane.xlu0 %663
  %v665 = vsel %vm628, %v624, 0.0
  %666 = vadd.xlane.f32.xlu0 %v665
  %v667 = vpop.xlane.xlu0 %666
  %v668 = vsel %vm628, %v625, 0.0
  %669 = vadd.xlane.f32.xlu0 %v668
  %v670 = vpop.xlane.xlu0 %669
  %v671 = vsel %vm628, %v626, 0.0
  %672 = vadd.xlane.f32.xlu0 %v671
  %v673 = vpop.xlane.xlu0 %672
  %v674 = vsel %vm628, %v627, 0.0
  %675 = vadd.xlane.f32.xlu0 %v674
  %v676 = vpop.xlane.xlu0 %675
  %s677 = sld [smem:[#allocation2]]
  %v678 = vstv %s677
  %v679 = vadd.f32 %v631, %v678
  %v680 = vadd.f32 %v634, %v678
  %v681 = vadd.f32 %v637, %v678
  %v682 = vadd.f32 %v640, %v678
  %v683 = vadd.f32 %v643, %v678
  %v684 = vadd.f32 %v646, %v678
  %v685 = vadd.f32 %v649, %v678
  %v686 = vadd.f32 %v652, %v678
  %v687 = vadd.f32 %v655, %v678
  %v688 = vadd.f32 %v658, %v678
  %v689 = vadd.f32 %v661, %v678
  %v690 = vadd.f32 %v664, %v678
  %v691 = vadd.f32 %v667, %v678
  %v692 = vadd.f32 %v670, %v678
  %v693 = vadd.f32 %v673, %v678
  %v694 = vadd.f32 %v676, %v678
  %v695 = vxor.u32 %v679, 2147483648
  %v696 = vxor.u32 %v680, 2147483648
  %v697 = vxor.u32 %v681, 2147483648
  %v698 = vxor.u32 %v682, 2147483648
  %v699 = vxor.u32 %v683, 2147483648
  %v700 = vxor.u32 %v684, 2147483648
  %v701 = vxor.u32 %v685, 2147483648
  %v702 = vxor.u32 %v686, 2147483648
  %v703 = vxor.u32 %v687, 2147483648
  %v704 = vxor.u32 %v688, 2147483648
  %v705 = vxor.u32 %v689, 2147483648
  %v706 = vxor.u32 %v690, 2147483648
  %v707 = vxor.u32 %v691, 2147483648
  %v708 = vxor.u32 %v692, 2147483648
  %v709 = vxor.u32 %v693, 2147483648
  %v710 = vxor.u32 %v694, 2147483648
  %v711 = vmul.f32 %v695, 1.442695
  %v712 = vpow.pop %v711
  %v713 = vmul.f32 %v696, 1.442695
  %v714 = vpow.pop %v713
  %v715 = vmul.f32 %v697, 1.442695
  %v716 = vpow.pop %v715
  %v717 = vmul.f32 %v698, 1.442695
  %v718 = vpow.pop %v717
  %v719 = vmul.f32 %v699, 1.442695
  %v720 = vpow.pop %v719
  %v721 = vmul.f32 %v700, 1.442695
  %v722 = vpow.pop %v721
  %v723 = vmul.f32 %v701, 1.442695
  %v724 = vpow.pop %v723
  %v725 = vmul.f32 %v702, 1.442695
  %v726 = vpow.pop %v725
  %v727 = vmul.f32 %v703, 1.442695
  %v728 = vpow.pop %v727
  %v729 = vmul.f32 %v704, 1.442695
  %v730 = vpow.pop %v729
  %v731 = vmul.f32 %v705, 1.442695
  %v732 = vpow.pop %v731
  %v733 = vmul.f32 %v706, 1.442695
  %v734 = vpow.pop %v733
  %v735 = vmul.f32 %v707, 1.442695
  %v736 = vpow.pop %v735
  %v737 = vmul.f32 %v708, 1.442695
  %v738 = vpow.pop %v737
  %v739 = vmul.f32 %v709, 1.442695
  %v740 = vpow.pop %v739
  %v741 = vmul.f32 %v710, 1.442695
  %v742 = vpow.pop %v741
  %v743 = vadd.f32 %v712, 1.0
  %v744 = vadd.f32 %v714, 1.0
  %v745 = vadd.f32 %v716, 1.0
  %v746 = vadd.f32 %v718, 1.0
  %v747 = vadd.f32 %v720, 1.0
  %v748 = vadd.f32 %v722, 1.0
  %v749 = vadd.f32 %v724, 1.0
  %v750 = vadd.f32 %v726, 1.0
  %v751 = vadd.f32 %v728, 1.0
  %v752 = vadd.f32 %v730, 1.0
  %v753 = vadd.f32 %v732, 1.0
  %v754 = vadd.f32 %v734, 1.0
  %v755 = vadd.f32 %v736, 1.0
  %v756 = vadd.f32 %v738, 1.0
  %v757 = vadd.f32 %v740, 1.0
  %v758 = vadd.f32 %v742, 1.0
  %v759 = vrcp.pop %v743
  %v760 = vmul.f32 1.0, %v759
  %v761 = vrcp.pop %v744
  %v762 = vmul.f32 1.0, %v761
  %v763 = vrcp.pop %v745
  %v764 = vmul.f32 1.0, %v763
  %v765 = vrcp.pop %v746
  %v766 = vmul.f32 1.0, %v765
  %v767 = vrcp.pop %v747
  %v768 = vmul.f32 1.0, %v767
  %v769 = vrcp.pop %v748
  %v770 = vmul.f32 1.0, %v769
  %v771 = vrcp.pop %v749
  %v772 = vmul.f32 1.0, %v771
  %v773 = vrcp.pop %v750
  %v774 = vmul.f32 1.0, %v773
  %v775 = vrcp.pop %v751
  %v776 = vmul.f32 1.0, %v775
  %v777 = vrcp.pop %v752
  %v778 = vmul.f32 1.0, %v777
  %v779 = vrcp.pop %v753
  %v780 = vmul.f32 1.0, %v779
  %v781 = vrcp.pop %v754
  %v782 = vmul.f32 1.0, %v781
  %v783 = vrcp.pop %v755
  %v784 = vmul.f32 1.0, %v783
  %v785 = vrcp.pop %v756
  %v786 = vmul.f32 1.0, %v785
  %v787 = vrcp.pop %v757
  %v788 = vmul.f32 1.0, %v787
  %v789 = vrcp.pop %v758
  %v790 = vmul.f32 1.0, %v789
  %vm791 = vcmask 7168
  %792 = vst.msk [vmem:[%s7] sm:$0xff] %vm791, %v760
  %793 = vst.msk [vmem:[%s7 + $0x8] sm:$0xff] %vm791, %v762
  %794 = vst.msk [vmem:[%s7 + $0x10] sm:$0xff] %vm791, %v764
  %795 = vst.msk [vmem:[%s7 + $0x18] sm:$0xff] %vm791, %v766
  %796 = vst.msk [vmem:[%s7 + $0x20] sm:$0xff] %vm791, %v768
  %797 = vst.msk [vmem:[%s7 + $0x28] sm:$0xff] %vm791, %v770
  %798 = vst.msk [vmem:[%s7 + $0x30] sm:$0xff] %vm791, %v772
  %799 = vst.msk [vmem:[%s7 + $0x38] sm:$0xff] %vm791, %v774
  %800 = vst.msk [vmem:[%s7 + $0x40] sm:$0xff] %vm791, %v776
  %801 = vst.msk [vmem:[%s7 + $0x48] sm:$0xff] %vm791, %v778
  %802 = vst.msk [vmem:[%s7 + $0x50] sm:$0xff] %vm791, %v780
  %803 = vst.msk [vmem:[%s7 + $0x58] sm:$0xff] %vm791, %v782
  %804 = vst.msk [vmem:[%s7 + $0x60] sm:$0xff] %vm791, %v784
  %805 = vst.msk [vmem:[%s7 + $0x68] sm:$0xff] %vm791, %v786
  %806 = vst.msk [vmem:[%s7 + $0x70] sm:$0xff] %vm791, %v788
  %807 = vst.msk [vmem:[%s7 + $0x78] sm:$0xff] %vm791, %v790
  // Predicated region
  $region30: #{tpu_custom_call.1} parent=0 // pred_check
    _
  $region31: #{tpu_custom_call.1} parent=0 // pred_check_branch
    %809 = sbr.rel (0) target = $region33
  $region32: #{tpu_custom_call.1} parent=0 // pred_region
    _
  $region33: #{tpu_custom_call.1} parent=0 // pred_fallthru
    _
  // Predicated region
  $region34: #{tpu_custom_call.1} parent=0 // pred_check
    _
  $region35: #{tpu_custom_call.1} parent=0 // pred_check_branch
    %811 = sbr.rel (0) target = $region37
  $region36: #{tpu_custom_call.1} parent=0 // pred_region
    _
  $region37: #{tpu_custom_call.1} parent=0 // pred_fallthru
    _

// kernel: tpu_custom_call.1
$region0: #{tpu_custom_call.1}
  #allocation0 [shape = 'u32[]', space=smem, size = 0x4, offset = 0x4, fixed_abs, tag = 'smem constant byte address 0x4 - core index']
  #allocation1 [shape = 'u32[144,128]{1,0:T(1,128)}', space=vmem, size = 0x12000, scoped, tag = 'internal scratch']
  #allocation2 [shape = 'f32[1,1]{1,0:T(1,128)S(6)}', space=smem, size = 0x200, scoped, tag = 'scoped memory for tpu_custom_call.1']
  %s0 = inlined_call_operand.vmem [shape: bf16[128,64], index: 0, kind: input, shape index: {}]
  %s1 = inlined_call_operand.vmem [shape: bf16[64,64], index: 1, kind: input, shape index: {}]
  %s2 = inlined_call_operand.vmem [shape: f32[1,64], index: 2, kind: input, shape index: {}]
  %s3 = inlined_call_operand.vmem [shape: bf16[64,32], index: 3, kind: input, shape index: {}]
  %s4 = inlined_call_operand.vmem [shape: f32[1,32], index: 4, kind: input, shape index: {}]
  %s5 = inlined_call_operand.vmem [shape: f32[1,32], index: 5, kind: input, shape index: {}]
  %s6 = inlined_call_operand.<no memory space> [shape: f32[1,1], index: 6, kind: input, shape index: {}]
  %s7 = inlined_call_operand.vmem [shape: f32[128,1], index: 7, kind: output, shape index: {}]
  %s8 = sld [smem:[#allocation0]]
  $region38: #{tpu_custom_call.1} parent=0
    _
  %s10 = ssub.s32 1, %s8
  %s11 = scalar_select 0, %s10, %s8
  %12 = sst [smem:[#allocation2]] %s6
  // Predicated region
  $region2: #{tpu_custom_call.1} parent=0 // pred_check
    _
  $region3: #{tpu_custom_call.1} parent=0 // pred_check_branch
    %14 = sbr.rel (0) target = $region5
  $region4: #{tpu_custom_call.1} parent=0 // pred_region
    _
  $region5: #{tpu_custom_call.1} parent=0 // pred_fallthru
    _
  // Predicated region
  $region6: #{tpu_custom_call.1} parent=0 // pred_check
    _
  $region7: #{tpu_custom_call.1} parent=0 // pred_check_branch
    %16 = sbr.rel (0) target = $region9
  $region8: #{tpu_custom_call.1} parent=0 // pred_region
    _
  $region9: #{tpu_custom_call.1} parent=0 // pred_fallthru
    _
  // Predicated region
  $region10: #{tpu_custom_call.1} parent=0 // pred_check
    _
  $region11: #{tpu_custom_call.1} parent=0 // pred_check_branch
    %18 = sbr.rel (0) target = $region13
  $region12: #{tpu_custom_call.1} parent=0 // pred_region
    _
  $region13: #{tpu_custom_call.1} parent=0 // pred_fallthru
    _
  // Predicated region
  $region14: #{tpu_custom_call.1} parent=0 // pred_check
    _
  $region15: #{tpu_custom_call.1} parent=0 // pred_check_branch
    %20 = sbr.rel (0) target = $region17
  $region16: #{tpu_custom_call.1} parent=0 // pred_region
    _
  $region17: #{tpu_custom_call.1} parent=0 // pred_fallthru
    _
  // Predicated region
  $region18: #{tpu_custom_call.1} parent=0 // pred_check
    _
  $region19: #{tpu_custom_call.1} parent=0 // pred_check_branch
    %22 = sbr.rel (0) target = $region21
  $region20: #{tpu_custom_call.1} parent=0 // pred_region
    _
  $region21: #{tpu_custom_call.1} parent=0 // pred_fallthru
    _
  // Predicated region
  $region22: #{tpu_custom_call.1} parent=0 // pred_check
    _
  $region23: #{tpu_custom_call.1} parent=0 // pred_check_branch
    %24 = sbr.rel (0) target = $region25
  $region24: #{tpu_custom_call.1} parent=0 // pred_region
    _
  $region25: #{tpu_custom_call.1} parent=0 // pred_fallthru
    _
  // Predicated region
  $region26: #{tpu_custom_call.1} parent=0 // pred_check
    _
  $region27: #{tpu_custom_call.1} parent=0 // pred_check_branch
    %26 = sbr.rel (0) target = $region29
  $region28: #{tpu_custom_call.1} parent=0 // pred_region
    _
  $region29: #{tpu_custom_call.1} parent=0 // pred_fallthru
    _
  %v28 = vld [vmem:[%s0] sm:$0xf]
  %v29 = vld [vmem:[%s0 + $0x4] sm:$0xf]
  %v30 = vld [vmem:[%s0 + $0x8] sm:$0xf]
  %v31 = vld [vmem:[%s0 + $0xc] sm:$0xf]
  %v32 = vld [vmem:[%s0 + $0x10] sm:$0xf]
  %v33 = vld [vmem:[%s0 + $0x14] sm:$0xf]
  %v34 = vld [vmem:[%s0 + $0x18] sm:$0xf]
  %v35 = vld [vmem:[%s0 + $0x1c] sm:$0xf]
  %v36 = vld [vmem:[%s0 + $0x20] sm:$0xf]
  %v37 = vld [vmem:[%s0 + $0x24] sm:$0xf]
  %v38 = vld [vmem:[%s0 + $0x28] sm:$0xf]
  %v39 = vld [vmem:[%s0 + $0x2c] sm:$0xf]
  %v40 = vld [vmem:[%s0 + $0x30] sm:$0xf]
  %v41 = vld [vmem:[%s0 + $0x34] sm:$0xf]
  %v42 = vld [vmem:[%s0 + $0x38] sm:$0xf]
  %v43 = vld [vmem:[%s0 + $0x3c] sm:$0xf]
  %v44 = vld [vmem:[%s1] sm:$0xf]
  %v45 = vld [vmem:[%s1 + $0x4] sm:$0xf]
  %v46 = vld [vmem:[%s1 + $0x8] sm:$0xf]
  %v47 = vld [vmem:[%s1 + $0xc] sm:$0xf]
  %v48 = vld [vmem:[%s1 + $0x10] sm:$0xf]
  %v49 = vld [vmem:[%s1 + $0x14] sm:$0xf]
  %v50 = vld [vmem:[%s1 + $0x18] sm:$0xf]
  %v51 = vld [vmem:[%s1 + $0x1c] sm:$0xf]
  %v52 = vld [vmem:[%s2] sm:$0x1]
  %v54 = vlaneseq
  %v55 = vshrl.u32 %v54, 7
  %v56 = vsub.s32 0, %v55
  %v57 = vrot.slane %v52, %v56
  %v75 = vunpack.c.l.b16 %v28
  %v76 = vunpack.c.l.b16 %v29
  %v77 = vunpack.c.l.b16 %v30
  %v78 = vunpack.c.l.b16 %v31
  %v79 = vunpack.c.l.b16 %v32
  %v80 = vunpack.c.l.b16 %v33
  %v81 = vunpack.c.l.b16 %v34
  %v82 = vunpack.c.l.b16 %v35
  %v83 = vunpack.c.l.b16 %v36
  %v84 = vunpack.c.l.b16 %v37
  %v85 = vunpack.c.l.b16 %v38
  %v86 = vunpack.c.l.b16 %v39
  %v87 = vunpack.c.l.b16 %v40
  %v88 = vunpack.c.l.b16 %v41
  %v89 = vunpack.c.l.b16 %v42
  %v90 = vunpack.c.l.b16 %v43
  %v91 = vpack.c.b16 %v76, %v75
  %v92 = vpack.c.b16 %v78, %v77
  %v93 = vpack.c.b16 %v80, %v79
  %v94 = vpack.c.b16 %v82, %v81
  %v95 = vpack.c.b16 %v84, %v83
  %v96 = vpack.c.b16 %v86, %v85
  %v97 = vpack.c.b16 %v88, %v87
  %v98 = vpack.c.b16 %v90, %v89
  %v107 = vunpack.c.l.b16 %v44
  %v108 = vunpack.c.l.b16 %v45
  %v109 = vunpack.c.l.b16 %v46
  %v110 = vunpack.c.l.b16 %v47
  %v111 = vunpack.c.l.b16 %v48
  %v112 = vunpack.c.l.b16 %v49
  %v113 = vunpack.c.l.b16 %v50
  %v114 = vunpack.c.l.b16 %v51
  %v115 = vpack.c.b16 %v108, %v107
  %v116 = vpack.c.b16 %v110, %v109
  %v117 = vpack.c.b16 %v112, %v111
  %v118 = vpack.c.b16 %v114, %v113
  %vm123 = vcmask 523264
  %v125 = vsel %vm123, %v91, 0
  %v128 = vsel %vm123, %v92, 0
  %v131 = vsel %vm123, %v93, 0
  %v134 = vsel %vm123, %v94, 0
  %v137 = vsel %vm123, %v95, 0
  %v140 = vsel %vm123, %v96, 0
  %v143 = vsel %vm123, %v97, 0
  %v146 = vsel %vm123, %v98, 0
  %148 = vmatprep.subr.bf16.mxu0 0
  %149 = vmatpush1.bf16.msra.mxu0 %v115
  %150 = vmatprep.subr.bf16.mxu0 0
  %151 = vmatpush1.bf16.msra.mxu0 %v116
  %152 = vmatprep.subr.bf16.mxu0 0
  %153 = vmatpush1.bf16.msra.mxu0 %v117
  %154 = vmatprep.subr.bf16.mxu0 0
  %155 = vmatpush1.bf16.msra.mxu0 %v118
  %156 = vmatprep.subr.bf16.mxu0 0
  %157 = vmatpush1.bf16.msra.mxu0 0
  %158 = vmatprep.subr.bf16.mxu0 0
  %159 = vmatpush1.bf16.msra.mxu0 0
  %160 = vmatprep.subr.bf16.mxu0 0
  %161 = vmatpush1.bf16.msra.mxu0 0
  %162 = vmatprep.subr.bf16.mxu0 0
  %163 = vmatpush1.bf16.msra.mxu0 0
  %164 = vmatprep.subr.bf16.mxu0 0
  %165 = vmatpush1.bf16.msra.mxu0 0
  %166 = vmatprep.subr.bf16.mxu0 0
  %167 = vmatpush1.bf16.msra.mxu0 0
  %168 = vmatprep.subr.bf16.mxu0 0
  %169 = vmatpush1.bf16.msra.mxu0 0
  %170 = vmatprep.subr.bf16.mxu0 0
  %171 = vmatpush1.bf16.msra.mxu0 0
  %172 = vmatprep.subr.bf16.mxu0 0
  %173 = vmatpush1.bf16.msra.mxu0 0
  %174 = vmatprep.subr.bf16.mxu0 0
  %175 = vmatpush1.bf16.msra.mxu0 0
  %176 = vmatprep.subr.bf16.mxu0 0
  %177 = vmatpush1.bf16.msra.mxu0 0
  %178 = vmatprep.subr.bf16.mxu0 0
  %179 = vmatpush1.bf16.msra.mxu0 0
  %180 = vmatprep.mubr.bf16.mxu0 0
  %181 = vmatmul.mubr.bf16.gmra.mrb[0].mxu0 %v125
  %v182 = vpop.f32.mrb[0].mxu0
  %v183 = vadd.f32 %v57, %v182
  %v184 = vpop.f32.mrb[0].mxu0
  %v185 = vpop.f32.mrb[0].mxu0
  %v186 = vadd.f32 %v57, %v185
  %v187 = vpop.f32.mrb[0].mxu0
  %188 = vmatprep.mubr.bf16.mxu0 0
  %189 = vmatmul.mubr.bf16.gmra.mrb[0].mxu0 %v128
  %v190 = vpop.f32.mrb[0].mxu0
  %v191 = vadd.f32 %v57, %v190
  %v192 = vpop.f32.mrb[0].mxu0
  %v193 = vpop.f32.mrb[0].mxu0
  %v194 = vadd.f32 %v57, %v193
  %v195 = vpop.f32.mrb[0].mxu0
  %196 = vmatprep.mubr.bf16.mxu0 0
  %197 = vmatmul.mubr.bf16.gmra.mrb[0].mxu0 %v131
  %v198 = vpop.f32.mrb[0].mxu0
  %v199 = vadd.f32 %v57, %v198
  %v200 = vpop.f32.mrb[0].mxu0
  %v201 = vpop.f32.mrb[0].mxu0
  %v202 = vadd.f32 %v57, %v201
  %v203 = vpop.f32.mrb[0].mxu0
  %204 = vmatprep.mubr.bf16.mxu0 0
  %205 = vmatmul.mubr.bf16.gmra.mrb[0].mxu0 %v134
  %v206 = vpop.f32.mrb[0].mxu0
  %v207 = vadd.f32 %v57, %v206
  %v208 = vpop.f32.mrb[0].mxu0
  %v209 = vpop.f32.mrb[0].mxu0
  %v210 = vadd.f32 %v57, %v209
  %v211 = vpop.f32.mrb[0].mxu0
  %212 = vmatprep.mubr.bf16.mxu0 0
  %213 = vmatmul.mubr.bf16.gmra.mrb[0].mxu0 %v137
  %v214 = vpop.f32.mrb[0].mxu0
  %v215 = vadd.f32 %v57, %v214
  %v216 = vpop.f32.mrb[0].mxu0
  %v217 = vpop.f32.mrb[0].mxu0
  %v218 = vadd.f32 %v57, %v217
  %v219 = vpop.f32.mrb[0].mxu0
  %220 = vmatprep.mubr.bf16.mxu0 0
  %221 = vmatmul.mubr.bf16.gmra.mrb[0].mxu0 %v140
  %v222 = vpop.f32.mrb[0].mxu0
  %v223 = vadd.f32 %v57, %v222
  %v224 = vpop.f32.mrb[0].mxu0
  %v225 = vpop.f32.mrb[0].mxu0
  %v226 = vadd.f32 %v57, %v225
  %v227 = vpop.f32.mrb[0].mxu0
  %228 = vmatprep.mubr.bf16.mxu0 0
  %229 = vmatmul.mubr.bf16.gmra.mrb[0].mxu0 %v143
  %v230 = vpop.f32.mrb[0].mxu0
  %v231 = vadd.f32 %v57, %v230
  %v232 = vpop.f32.mrb[0].mxu0
  %v233 = vpop.f32.mrb[0].mxu0
  %v234 = vadd.f32 %v57, %v233
  %v235 = vpop.f32.mrb[0].mxu0
  %236 = vmatprep.mubr.bf16.mxu0 0
  %237 = vmatmul.mubr.bf16.gmra.mrb[0].mxu0 %v146
  %v238 = vpop.f32.mrb[0].mxu0
  %v239 = vadd.f32 %v57, %v238
  %v240 = vpop.f32.mrb[0].mxu0
  %v241 = vpop.f32.mrb[0].mxu0
  %v242 = vadd.f32 %v57, %v241
  %v243 = vpop.f32.mrb[0].mxu0
  %244 = vdwg.mxu0
  %v245 = vxor.u32 %v183, 2147483648
  %v246 = vxor.u32 %v186, 2147483648
  %v247 = vxor.u32 %v191, 2147483648
  %v248 = vxor.u32 %v194, 2147483648
  %v249 = vxor.u32 %v199, 2147483648
  %v250 = vxor.u32 %v202, 2147483648
  %v251 = vxor.u32 %v207, 2147483648
  %v252 = vxor.u32 %v210, 2147483648
  %v253 = vxor.u32 %v215, 2147483648
  %v254 = vxor.u32 %v218, 2147483648
  %v255 = vxor.u32 %v223, 2147483648
  %v256 = vxor.u32 %v226, 2147483648
  %v257 = vxor.u32 %v231, 2147483648
  %v258 = vxor.u32 %v234, 2147483648
  %v259 = vxor.u32 %v239, 2147483648
  %v260 = vxor.u32 %v242, 2147483648
  %v261 = vmul.f32 %v245, 1.442695
  %v262 = vpow.pop %v261
  %v263 = vmul.f32 %v246, 1.442695
  %v264 = vpow.pop %v263
  %v265 = vmul.f32 %v247, 1.442695
  %v266 = vpow.pop %v265
  %v267 = vmul.f32 %v248, 1.442695
  %v268 = vpow.pop %v267
  %v269 = vmul.f32 %v249, 1.442695
  %v270 = vpow.pop %v269
  %v271 = vmul.f32 %v250, 1.442695
  %v272 = vpow.pop %v271
  %v273 = vmul.f32 %v251, 1.442695
  %v274 = vpow.pop %v273
  %v275 = vmul.f32 %v252, 1.442695
  %v276 = vpow.pop %v275
  %v277 = vmul.f32 %v253, 1.442695
  %v278 = vpow.pop %v277
  %v279 = vmul.f32 %v254, 1.442695
  %v280 = vpow.pop %v279
  %v281 = vmul.f32 %v255, 1.442695
  %v282 = vpow.pop %v281
  %v283 = vmul.f32 %v256, 1.442695
  %v284 = vpow.pop %v283
  %v285 = vmul.f32 %v257, 1.442695
  %v286 = vpow.pop %v285
  %v287 = vmul.f32 %v258, 1.442695
  %v288 = vpow.pop %v287
  %v289 = vmul.f32 %v259, 1.442695
  %v290 = vpow.pop %v289
  %v291 = vmul.f32 %v260, 1.442695
  %v292 = vpow.pop %v291
  %v293 = vadd.f32 %v262, 1.0
  %v294 = vadd.f32 %v264, 1.0
  %v295 = vadd.f32 %v266, 1.0
  %v296 = vadd.f32 %v268, 1.0
  %v297 = vadd.f32 %v270, 1.0
  %v298 = vadd.f32 %v272, 1.0
  %v299 = vadd.f32 %v274, 1.0
  %v300 = vadd.f32 %v276, 1.0
  %v301 = vadd.f32 %v278, 1.0
  %v302 = vadd.f32 %v280, 1.0
  %v303 = vadd.f32 %v282, 1.0
  %v304 = vadd.f32 %v284, 1.0
  %v305 = vadd.f32 %v286, 1.0
  %v306 = vadd.f32 %v288, 1.0
  %v307 = vadd.f32 %v290, 1.0
  %v308 = vadd.f32 %v292, 1.0
  %v309 = vrcp.pop %v293
  %v310 = vmul.f32 1.0, %v309
  %v311 = vrcp.pop %v294
  %v312 = vmul.f32 1.0, %v311
  %v313 = vrcp.pop %v295
  %v314 = vmul.f32 1.0, %v313
  %v315 = vrcp.pop %v296
  %v316 = vmul.f32 1.0, %v315
  %v317 = vrcp.pop %v297
  %v318 = vmul.f32 1.0, %v317
  %v319 = vrcp.pop %v298
  %v320 = vmul.f32 1.0, %v319
  %v321 = vrcp.pop %v299
  %v322 = vmul.f32 1.0, %v321
  %v323 = vrcp.pop %v300
  %v324 = vmul.f32 1.0, %v323
  %v325 = vrcp.pop %v301
  %v326 = vmul.f32 1.0, %v325
  %v327 = vrcp.pop %v302
  %v328 = vmul.f32 1.0, %v327
  %v329 = vrcp.pop %v303
  %v330 = vmul.f32 1.0, %v329
  %v331 = vrcp.pop %v304
  %v332 = vmul.f32 1.0, %v331
  %v333 = vrcp.pop %v305
  %v334 = vmul.f32 1.0, %v333
  %v335 = vrcp.pop %v306
  %v336 = vmul.f32 1.0, %v335
  %v337 = vrcp.pop %v307
  %v338 = vmul.f32 1.0, %v337
  %v339 = vrcp.pop %v308
  %v340 = vmul.f32 1.0, %v339
  %v341 = vpack.c.bf16 %v312, %v310
  %v342 = vpack.c.bf16 %v316, %v314
  %v343 = vpack.c.bf16 %v320, %v318
  %v344 = vpack.c.bf16 %v324, %v322
  %v345 = vpack.c.bf16 %v328, %v326
  %v346 = vpack.c.bf16 %v332, %v330
  %v347 = vpack.c.bf16 %v336, %v334
  %v348 = vpack.c.bf16 %v340, %v338
  %v349 = vld [vmem:[%s3] sm:$0xf]
  %v350 = vld [vmem:[%s3 + $0x4] sm:$0xf]
  %v351 = vld [vmem:[%s3 + $0x8] sm:$0xf]
  %v352 = vld [vmem:[%s3 + $0xc] sm:$0xf]
  %v353 = vld [vmem:[%s3 + $0x10] sm:$0xf]
  %v354 = vld [vmem:[%s3 + $0x14] sm:$0xf]
  %v355 = vld [vmem:[%s3 + $0x18] sm:$0xf]
  %v356 = vld [vmem:[%s3 + $0x1c] sm:$0xf]
  %v357 = vld [vmem:[%s4] sm:$0x1]
  %v359 = vlaneseq
  %v360 = vshrl.u32 %v359, 7
  %v361 = vsub.s32 0, %v360
  %v362 = vrot.slane %v357, %v361
  %v372 = vunpack.c.l.b16 %v349
  %v373 = vunpack.c.l.b16 %v350
  %v374 = vunpack.c.l.b16 %v351
  %v375 = vunpack.c.l.b16 %v352
  %v376 = vunpack.c.l.b16 %v353
  %v377 = vunpack.c.l.b16 %v354
  %v378 = vunpack.c.l.b16 %v355
  %v379 = vunpack.c.l.b16 %v356
  %v380 = vpack.c.b16 %v373, %v372
  %v381 = vpack.c.b16 %v375, %v374
  %v382 = vpack.c.b16 %v377, %v376
  %v383 = vpack.c.b16 %v379, %v378
  %v389 = vsel %vm123, %v341, 0
  %v392 = vsel %vm123, %v342, 0
  %v395 = vsel %vm123, %v343, 0
  %v398 = vsel %vm123, %v344, 0
  %v401 = vsel %vm123, %v345, 0
  %v404 = vsel %vm123, %v346, 0
  %v407 = vsel %vm123, %v347, 0
  %v410 = vsel %vm123, %v348, 0
  %412 = vmatprep.subr.bf16.mxu0 0
  %413 = vmatpush1.bf16.msra.mxu0 %v380
  %414 = vmatprep.subr.bf16.mxu0 0
  %415 = vmatpush1.bf16.msra.mxu0 %v381
  %416 = vmatprep.subr.bf16.mxu0 0
  %417 = vmatpush1.bf16.msra.mxu0 %v382
  %418 = vmatprep.subr.bf16.mxu0 0
  %419 = vmatpush1.bf16.msra.mxu0 %v383
  %420 = vmatprep.subr.bf16.mxu0 0
  %421 = vmatpush1.bf16.msra.mxu0 0
  %422 = vmatprep.subr.bf16.mxu0 0
  %423 = vmatpush1.bf16.msra.mxu0 0
  %424 = vmatprep.subr.bf16.mxu0 0
  %425 = vmatpush1.bf16.msra.mxu0 0
  %426 = vmatprep.subr.bf16.mxu0 0
  %427 = vmatpush1.bf16.msra.mxu0 0
  %428 = vmatprep.subr.bf16.mxu0 0
  %429 = vmatpush1.bf16.msra.mxu0 0
  %430 = vmatprep.subr.bf16.mxu0 0
  %431 = vmatpush1.bf16.msra.mxu0 0
  %432 = vmatprep.subr.bf16.mxu0 0
  %433 = vmatpush1.bf16.msra.mxu0 0
  %434 = vmatprep.subr.bf16.mxu0 0
  %435 = vmatpush1.bf16.msra.mxu0 0
  %436 = vmatprep.subr.bf16.mxu0 0
  %437 = vmatpush1.bf16.msra.mxu0 0
  %438 = vmatprep.subr.bf16.mxu0 0
  %439 = vmatpush1.bf16.msra.mxu0 0
  %440 = vmatprep.subr.bf16.mxu0 0
  %441 = vmatpush1.bf16.msra.mxu0 0
  %442 = vmatprep.subr.bf16.mxu0 0
  %443 = vmatpush1.bf16.msra.mxu0 0
  %444 = vmatprep.mubr.bf16.mxu0 0
  %445 = vmatmul.mubr.bf16.gmra.mrb[0].mxu0 %v389
  %v446 = vpop.f32.mrb[0].mxu0
  %v447 = vadd.f32 %v362, %v446
  %v448 = vpop.f32.mrb[0].mxu0
  %v449 = vpop.f32.mrb[0].mxu0
  %v450 = vadd.f32 %v362, %v449
  %v451 = vpop.f32.mrb[0].mxu0
  %452 = vmatprep.mubr.bf16.mxu0 0
  %453 = vmatmul.mubr.bf16.gmra.mrb[0].mxu0 %v392
  %v454 = vpop.f32.mrb[0].mxu0
  %v455 = vadd.f32 %v362, %v454
  %v456 = vpop.f32.mrb[0].mxu0
  %v457 = vpop.f32.mrb[0].mxu0
  %v458 = vadd.f32 %v362, %v457
  %v459 = vpop.f32.mrb[0].mxu0
  %460 = vmatprep.mubr.bf16.mxu0 0
  %461 = vmatmul.mubr.bf16.gmra.mrb[0].mxu0 %v395
  %v462 = vpop.f32.mrb[0].mxu0
  %v463 = vadd.f32 %v362, %v462
  %v464 = vpop.f32.mrb[0].mxu0
  %v465 = vpop.f32.mrb[0].mxu0
  %v466 = vadd.f32 %v362, %v465
  %v467 = vpop.f32.mrb[0].mxu0
  %468 = vmatprep.mubr.bf16.mxu0 0
  %469 = vmatmul.mubr.bf16.gmra.mrb[0].mxu0 %v398
  %v470 = vpop.f32.mrb[0].mxu0
  %v471 = vadd.f32 %v362, %v470
  %v472 = vpop.f32.mrb[0].mxu0
  %v473 = vpop.f32.mrb[0].mxu0
  %v474 = vadd.f32 %v362, %v473
  %v475 = vpop.f32.mrb[0].mxu0
  %476 = vmatprep.mubr.bf16.mxu0 0
  %477 = vmatmul.mubr.bf16.gmra.mrb[0].mxu0 %v401
  %v478 = vpop.f32.mrb[0].mxu0
  %v479 = vadd.f32 %v362, %v478
  %v480 = vpop.f32.mrb[0].mxu0
  %v481 = vpop.f32.mrb[0].mxu0
  %v482 = vadd.f32 %v362, %v481
  %v483 = vpop.f32.mrb[0].mxu0
  %484 = vmatprep.mubr.bf16.mxu0 0
  %485 = vmatmul.mubr.bf16.gmra.mrb[0].mxu0 %v404
  %v486 = vpop.f32.mrb[0].mxu0
  %v487 = vadd.f32 %v362, %v486
  %v488 = vpop.f32.mrb[0].mxu0
  %v489 = vpop.f32.mrb[0].mxu0
  %v490 = vadd.f32 %v362, %v489
  %v491 = vpop.f32.mrb[0].mxu0
  %492 = vmatprep.mubr.bf16.mxu0 0
  %493 = vmatmul.mubr.bf16.gmra.mrb[0].mxu0 %v407
  %v494 = vpop.f32.mrb[0].mxu0
  %v495 = vadd.f32 %v362, %v494
  %v496 = vpop.f32.mrb[0].mxu0
  %v497 = vpop.f32.mrb[0].mxu0
  %v498 = vadd.f32 %v362, %v497
  %v499 = vpop.f32.mrb[0].mxu0
  %500 = vmatprep.mubr.bf16.mxu0 0
  %501 = vmatmul.mubr.bf16.gmra.mrb[0].mxu0 %v410
  %v502 = vpop.f32.mrb[0].mxu0
  %v503 = vadd.f32 %v362, %v502
  %v504 = vpop.f32.mrb[0].mxu0
  %v505 = vpop.f32.mrb[0].mxu0
  %v506 = vadd.f32 %v362, %v505
  %v507 = vpop.f32.mrb[0].mxu0
  %508 = vdwg.mxu0
  %v509 = vxor.u32 %v447, 2147483648
  %v510 = vxor.u32 %v450, 2147483648
  %v511 = vxor.u32 %v455, 2147483648
  %v512 = vxor.u32 %v458, 2147483648
  %v513 = vxor.u32 %v463, 2147483648
  %v514 = vxor.u32 %v466, 2147483648
  %v515 = vxor.u32 %v471, 2147483648
  %v516 = vxor.u32 %v474, 2147483648
  %v517 = vxor.u32 %v479, 2147483648
  %v518 = vxor.u32 %v482, 2147483648
  %v519 = vxor.u32 %v487, 2147483648
  %v520 = vxor.u32 %v490, 2147483648
  %v521 = vxor.u32 %v495, 2147483648
  %v522 = vxor.u32 %v498, 2147483648
  %v523 = vxor.u32 %v503, 2147483648
  %v524 = vxor.u32 %v506, 2147483648
  %v525 = vmul.f32 %v509, 1.442695
  %v526 = vpow.pop %v525
  %v527 = vmul.f32 %v510, 1.442695
  %v528 = vpow.pop %v527
  %v529 = vmul.f32 %v511, 1.442695
  %v530 = vpow.pop %v529
  %v531 = vmul.f32 %v512, 1.442695
  %v532 = vpow.pop %v531
  %v533 = vmul.f32 %v513, 1.442695
  %v534 = vpow.pop %v533
  %v535 = vmul.f32 %v514, 1.442695
  %v536 = vpow.pop %v535
  %v537 = vmul.f32 %v515, 1.442695
  %v538 = vpow.pop %v537
  %v539 = vmul.f32 %v516, 1.442695
  %v540 = vpow.pop %v539
  %v541 = vmul.f32 %v517, 1.442695
  %v542 = vpow.pop %v541
  %v543 = vmul.f32 %v518, 1.442695
  %v544 = vpow.pop %v543
  %v545 = vmul.f32 %v519, 1.442695
  %v546 = vpow.pop %v545
  %v547 = vmul.f32 %v520, 1.442695
  %v548 = vpow.pop %v547
  %v549 = vmul.f32 %v521, 1.442695
  %v550 = vpow.pop %v549
  %v551 = vmul.f32 %v522, 1.442695
  %v552 = vpow.pop %v551
  %v553 = vmul.f32 %v523, 1.442695
  %v554 = vpow.pop %v553
  %v555 = vmul.f32 %v524, 1.442695
  %v556 = vpow.pop %v555
  %v557 = vadd.f32 %v526, 1.0
  %v558 = vadd.f32 %v528, 1.0
  %v559 = vadd.f32 %v530, 1.0
  %v560 = vadd.f32 %v532, 1.0
  %v561 = vadd.f32 %v534, 1.0
  %v562 = vadd.f32 %v536, 1.0
  %v563 = vadd.f32 %v538, 1.0
  %v564 = vadd.f32 %v540, 1.0
  %v565 = vadd.f32 %v542, 1.0
  %v566 = vadd.f32 %v544, 1.0
  %v567 = vadd.f32 %v546, 1.0
  %v568 = vadd.f32 %v548, 1.0
  %v569 = vadd.f32 %v550, 1.0
  %v570 = vadd.f32 %v552, 1.0
  %v571 = vadd.f32 %v554, 1.0
  %v572 = vadd.f32 %v556, 1.0
  %v573 = vrcp.pop %v557
  %v574 = vmul.f32 1.0, %v573
  %v575 = vrcp.pop %v558
  %v576 = vmul.f32 1.0, %v575
  %v577 = vrcp.pop %v559
  %v578 = vmul.f32 1.0, %v577
  %v579 = vrcp.pop %v560
  %v580 = vmul.f32 1.0, %v579
  %v581 = vrcp.pop %v561
  %v582 = vmul.f32 1.0, %v581
  %v583 = vrcp.pop %v562
  %v584 = vmul.f32 1.0, %v583
  %v585 = vrcp.pop %v563
  %v586 = vmul.f32 1.0, %v585
  %v587 = vrcp.pop %v564
  %v588 = vmul.f32 1.0, %v587
  %v589 = vrcp.pop %v565
  %v590 = vmul.f32 1.0, %v589
  %v591 = vrcp.pop %v566
  %v592 = vmul.f32 1.0, %v591
  %v593 = vrcp.pop %v567
  %v594 = vmul.f32 1.0, %v593
  %v595 = vrcp.pop %v568
  %v596 = vmul.f32 1.0, %v595
  %v597 = vrcp.pop %v569
  %v598 = vmul.f32 1.0, %v597
  %v599 = vrcp.pop %v570
  %v600 = vmul.f32 1.0, %v599
  %v601 = vrcp.pop %v571
  %v602 = vmul.f32 1.0, %v601
  %v603 = vrcp.pop %v572
  %v604 = vmul.f32 1.0, %v603
  %v605 = vld [vmem:[%s5] sm:$0x1]
  %v607 = vlaneseq
  %v608 = vshrl.u32 %v607, 7
  %v609 = vsub.s32 0, %v608
  %v610 = vrot.slane %v605, %v609
  %v612 = vmul.f32 %v574, %v610
  %v613 = vmul.f32 %v576, %v610
  %v614 = vmul.f32 %v578, %v610
  %v615 = vmul.f32 %v580, %v610
  %v616 = vmul.f32 %v582, %v610
  %v617 = vmul.f32 %v584, %v610
  %v618 = vmul.f32 %v586, %v610
  %v619 = vmul.f32 %v588, %v610
  %v620 = vmul.f32 %v590, %v610
  %v621 = vmul.f32 %v592, %v610
  %v622 = vmul.f32 %v594, %v610
  %v623 = vmul.f32 %v596, %v610
  %v624 = vmul.f32 %v598, %v610
  %v625 = vmul.f32 %v600, %v610
  %v626 = vmul.f32 %v602, %v610
  %v627 = vmul.f32 %v604, %v610
  %vm628 = vcmask 261120
  %v629 = vsel %vm628, %v612, 0.0
  %630 = vadd.xlane.f32.xlu0 %v629
  %v631 = vpop.xlane.xlu0 %630
  %v632 = vsel %vm628, %v613, 0.0
  %633 = vadd.xlane.f32.xlu0 %v632
  %v634 = vpop.xlane.xlu0 %633
  %v635 = vsel %vm628, %v614, 0.0
  %636 = vadd.xlane.f32.xlu0 %v635
  %v637 = vpop.xlane.xlu0 %636
  %v638 = vsel %vm628, %v615, 0.0
  %639 = vadd.xlane.f32.xlu0 %v638
  %v640 = vpop.xlane.xlu0 %639
  %v641 = vsel %vm628, %v616, 0.0
  %642 = vadd.xlane.f32.xlu0 %v641
  %v643 = vpop.xlane.xlu0 %642
  %v644 = vsel %vm628, %v617, 0.0
  %645 = vadd.xlane.f32.xlu0 %v644
  %v646 = vpop.xlane.xlu0 %645
  %v647 = vsel %vm628, %v618, 0.0
  %648 = vadd.xlane.f32.xlu0 %v647
  %v649 = vpop.xlane.xlu0 %648
  %v650 = vsel %vm628, %v619, 0.0
  %651 = vadd.xlane.f32.xlu0 %v650
  %v652 = vpop.xlane.xlu0 %651
  %v653 = vsel %vm628, %v620, 0.0
  %654 = vadd.xlane.f32.xlu0 %v653
  %v655 = vpop.xlane.xlu0 %654
  %v656 = vsel %vm628, %v621, 0.0
  %657 = vadd.xlane.f32.xlu0 %v656
  %v658 = vpop.xlane.xlu0 %657
  %v659 = vsel %vm628, %v622, 0.0
  %660 = vadd.xlane.f32.xlu0 %v659
  %v661 = vpop.xlane.xlu0 %660
  %v662 = vsel %vm628, %v623, 0.0
  %663 = vadd.xlane.f32.xlu0 %v662
  %v664 = vpop.xlane.xlu0 %663
  %v665 = vsel %vm628, %v624, 0.0
  %666 = vadd.xlane.f32.xlu0 %v665
  %v667 = vpop.xlane.xlu0 %666
  %v668 = vsel %vm628, %v625, 0.0
  %669 = vadd.xlane.f32.xlu0 %v668
  %v670 = vpop.xlane.xlu0 %669
  %v671 = vsel %vm628, %v626, 0.0
  %672 = vadd.xlane.f32.xlu0 %v671
  %v673 = vpop.xlane.xlu0 %672
  %v674 = vsel %vm628, %v627, 0.0
  %675 = vadd.xlane.f32.xlu0 %v674
  %v676 = vpop.xlane.xlu0 %675
  %s677 = sld [smem:[#allocation2]]
  %v678 = vstv %s677
  %v679 = vadd.f32 %v631, %v678
  %v680 = vadd.f32 %v634, %v678
  %v681 = vadd.f32 %v637, %v678
  %v682 = vadd.f32 %v640, %v678
  %v683 = vadd.f32 %v643, %v678
  %v684 = vadd.f32 %v646, %v678
  %v685 = vadd.f32 %v649, %v678
  %v686 = vadd.f32 %v652, %v678
  %v687 = vadd.f32 %v655, %v678
  %v688 = vadd.f32 %v658, %v678
  %v689 = vadd.f32 %v661, %v678
  %v690 = vadd.f32 %v664, %v678
  %v691 = vadd.f32 %v667, %v678
  %v692 = vadd.f32 %v670, %v678
  %v693 = vadd.f32 %v673, %v678
  %v694 = vadd.f32 %v676, %v678
  %v695 = vxor.u32 %v679, 2147483648
  %v696 = vxor.u32 %v680, 2147483648
  %v697 = vxor.u32 %v681, 2147483648
  %v698 = vxor.u32 %v682, 2147483648
  %v699 = vxor.u32 %v683, 2147483648
  %v700 = vxor.u32 %v684, 2147483648
  %v701 = vxor.u32 %v685, 2147483648
  %v702 = vxor.u32 %v686, 2147483648
  %v703 = vxor.u32 %v687, 2147483648
  %v704 = vxor.u32 %v688, 2147483648
  %v705 = vxor.u32 %v689, 2147483648
  %v706 = vxor.u32 %v690, 2147483648
  %v707 = vxor.u32 %v691, 2147483648
  %v708 = vxor.u32 %v692, 2147483648
  %v709 = vxor.u32 %v693, 2147483648
  %v710 = vxor.u32 %v694, 2147483648
  %v711 = vmul.f32 %v695, 1.442695
  %v712 = vpow.pop %v711
  %v713 = vmul.f32 %v696, 1.442695
  %v714 = vpow.pop %v713
  %v715 = vmul.f32 %v697, 1.442695
  %v716 = vpow.pop %v715
  %v717 = vmul.f32 %v698, 1.442695
  %v718 = vpow.pop %v717
  %v719 = vmul.f32 %v699, 1.442695
  %v720 = vpow.pop %v719
  %v721 = vmul.f32 %v700, 1.442695
  %v722 = vpow.pop %v721
  %v723 = vmul.f32 %v701, 1.442695
  %v724 = vpow.pop %v723
  %v725 = vmul.f32 %v702, 1.442695
  %v726 = vpow.pop %v725
  %v727 = vmul.f32 %v703, 1.442695
  %v728 = vpow.pop %v727
  %v729 = vmul.f32 %v704, 1.442695
  %v730 = vpow.pop %v729
  %v731 = vmul.f32 %v705, 1.442695
  %v732 = vpow.pop %v731
  %v733 = vmul.f32 %v706, 1.442695
  %v734 = vpow.pop %v733
  %v735 = vmul.f32 %v707, 1.442695
  %v736 = vpow.pop %v735
  %v737 = vmul.f32 %v708, 1.442695
  %v738 = vpow.pop %v737
  %v739 = vmul.f32 %v709, 1.442695
  %v740 = vpow.pop %v739
  %v741 = vmul.f32 %v710, 1.442695
  %v742 = vpow.pop %v741
  %v743 = vadd.f32 %v712, 1.0
  %v744 = vadd.f32 %v714, 1.0
  %v745 = vadd.f32 %v716, 1.0
  %v746 = vadd.f32 %v718, 1.0
  %v747 = vadd.f32 %v720, 1.0
  %v748 = vadd.f32 %v722, 1.0
  %v749 = vadd.f32 %v724, 1.0
  %v750 = vadd.f32 %v726, 1.0
  %v751 = vadd.f32 %v728, 1.0
  %v752 = vadd.f32 %v730, 1.0
  %v753 = vadd.f32 %v732, 1.0
  %v754 = vadd.f32 %v734, 1.0
  %v755 = vadd.f32 %v736, 1.0
  %v756 = vadd.f32 %v738, 1.0
  %v757 = vadd.f32 %v740, 1.0
  %v758 = vadd.f32 %v742, 1.0
  %v759 = vrcp.pop %v743
  %v760 = vmul.f32 1.0, %v759
  %v761 = vrcp.pop %v744
  %v762 = vmul.f32 1.0, %v761
  %v763 = vrcp.pop %v745
  %v764 = vmul.f32 1.0, %v763
  %v765 = vrcp.pop %v746
  %v766 = vmul.f32 1.0, %v765
  %v767 = vrcp.pop %v747
  %v768 = vmul.f32 1.0, %v767
  %v769 = vrcp.pop %v748
  %v770 = vmul.f32 1.0, %v769
  %v771 = vrcp.pop %v749
  %v772 = vmul.f32 1.0, %v771
  %v773 = vrcp.pop %v750
  %v774 = vmul.f32 1.0, %v773
  %v775 = vrcp.pop %v751
  %v776 = vmul.f32 1.0, %v775
  %v777 = vrcp.pop %v752
  %v778 = vmul.f32 1.0, %v777
  %v779 = vrcp.pop %v753
  %v780 = vmul.f32 1.0, %v779
  %v781 = vrcp.pop %v754
  %v782 = vmul.f32 1.0, %v781
  %v783 = vrcp.pop %v755
  %v784 = vmul.f32 1.0, %v783
  %v785 = vrcp.pop %v756
  %v786 = vmul.f32 1.0, %v785
  %v787 = vrcp.pop %v757
  %v788 = vmul.f32 1.0, %v787
  %v789 = vrcp.pop %v758
  %v790 = vmul.f32 1.0, %v789
  %vm791 = vcmask 7168
  %792 = vst.msk [vmem:[%s7] sm:$0xff] %vm791, %v760
  %793 = vst.msk [vmem:[%s7 + $0x8] sm:$0xff] %vm791, %v762
  %794 = vst.msk [vmem:[%s7 + $0x10] sm:$0xff] %vm791, %v764
  %795 = vst.msk [vmem:[%s7 + $0x18] sm:$0xff] %vm791, %v766
  %796 = vst.msk [vmem:[%s7 + $0x20] sm:$0xff] %vm791, %v768
  %797 = vst.msk [vmem:[%s7 + $0x28] sm:$0xff] %vm791, %v770
  %798 = vst.msk [vmem:[%s7 + $0x30] sm:$0xff] %vm791, %v772
  %799 = vst.msk [vmem:[%s7 + $0x38] sm:$0xff] %vm791, %v774
  %800 = vst.msk [vmem:[%s7 + $0x40] sm:$0xff] %vm791, %v776
  %801 = vst.msk [vmem:[%s7 + $0x48] sm:$0xff] %vm791, %v778
  %802 = vst.msk [vmem:[%s7 + $0x50] sm:$0xff] %vm791, %v780
  %803 = vst.msk [vmem:[%s7 + $0x58] sm:$0xff] %vm791, %v782
  %804 = vst.msk [vmem:[%s7 + $0x60] sm:$0xff] %vm791, %v784
  %805 = vst.msk [vmem:[%s7 + $0x68] sm:$0xff] %vm791, %v786
  %806 = vst.msk [vmem:[%s7 + $0x70] sm:$0xff] %vm791, %v788
  %807 = vst.msk [vmem:[%s7 + $0x78] sm:$0xff] %vm791, %v790
  // Predicated region
  $region30: #{tpu_custom_call.1} parent=0 // pred_check
    _
  $region31: #{tpu_custom_call.1} parent=0 // pred_check_branch
    %809 = sbr.rel (0) target = $region33
  $region32: #{tpu_custom_call.1} parent=0 // pred_region
    _
  $region33: #{tpu_custom_call.1} parent=0 // pred_fallthru
    _
  // Predicated region
  $region34: #{tpu_custom_call.1} parent=0 // pred_check
    _
  $region35: #{tpu_custom_call.1} parent=0 // pred_check_branch
    %811 = sbr.rel (0) target = $region37
  $region36: #{tpu_custom_call.1} parent=0 // pred_region
    _
  $region37: #{tpu_custom_call.1} parent=0 // pred_fallthru
    _

</llo_original>
